<compile_context>
chip_gen: v7x
topology: tpu7x:2x2x1
jax: 0.10.0
libtpu: 0.0.40
codegen_flags: <defaults>
</compile_context>

<pallas_src>
import functools
import math

import jax
import jax.numpy as jnp
from jax import lax
from jax.experimental import pallas as pl
from jax.experimental.pallas import tpu as pltpu

LANES = 128
BN_EPS = 1e-4  # nn.BatchNorm2d(..., eps=0.0001) in the reference module.


def _round_up(v, m):
    return ((v + m - 1) // m) * m


def _pick_row_block(rows, cols, target=1024, cap=32):
    """Largest divisor `th` of `rows` (<= cap) with th*cols <= max(target, cols)."""
    best = 1
    limit = max(target, cols)
    for th in range(1, min(rows, cap) + 1):
        if rows % th == 0 and th * cols <= limit:
            best = th
    return best


# ----------------------------------------------------------------------------
# Stage 1: im2col (JAX, bf16) + fused matmul + bias + ReLU (Pallas).
# ----------------------------------------------------------------------------
def _mm_bias_relu_kernel(x_ref, w_ref, b_ref, o_ref):
    # x: (1, TH, Wo, K) bf16 ; w: (K, N) bf16 (BN scale folded) ; b: (1, N) f32
    # o: (1, TH, Wo, N)
    _, th, wo, k = x_ref.shape
    n = o_ref.shape[-1]
    x2 = x_ref[...].reshape(th * wo, k)
    y = jnp.dot(x2, w_ref[...], preferred_element_type=jnp.float32)
    y = jnp.maximum(y + b_ref[...], 0.0)
    o_ref[...] = y.reshape(1, th, wo, n).astype(o_ref.dtype)


def conv1_im2col_bias_relu(x_nhwc_bf16, w_flat, bias, out_dtype):
    """3x3 / stride 2 / pad 1 conv + folded BN + ReLU for the 3-channel input.

    The raw input has only `in_channels` channels, so the im2col expansion is
    tiny (<=2.25x of a 3-channel image, already in bf16); fusing patch
    extraction into the kernel only pays for the wide stage 2.
    """
    B, H, W, C = x_nhwc_bf16.shape
    Ho, Wo = H // 2, W // 2
    K = 9 * C
    N = w_flat.shape[1]

    xp = jnp.pad(x_nhwc_bf16, ((0, 0), (1, 1), (1, 1), (0, 0)))
    taps = []
    for kh in range(3):
        for kw in range(3):
            taps.append(xp[:, kh:kh + 2 * Ho:2, kw:kw + 2 * Wo:2, :])
    # (B, Ho, Wo, 9, C) -> (B, Ho, Wo, 9*C)  [tap-major, cin-minor]
    patches = jnp.stack(taps, axis=3).reshape(B, Ho, Wo, K)

    th = _pick_row_block(Ho, Wo)
    grid = (B, Ho // th)
    return pl.pallas_call(
        _mm_bias_relu_kernel,
        grid=grid,
        in_specs=[
            pl.BlockSpec((1, th, Wo, K), lambda b, i: (b, i, 0, 0)),
            pl.BlockSpec((K, N), lambda b, i: (0, 0)),
            pl.BlockSpec((1, N), lambda b, i: (0, 0)),
        ],
        out_specs=pl.BlockSpec((1, th, Wo, N), lambda b, i: (b, i, 0, 0)),
        out_shape=jax.ShapeDtypeStruct((B, Ho, Wo, N), out_dtype),
        compiler_params=pltpu.CompilerParams(
            dimension_semantics=("parallel", "parallel")),
    )(patches, w_flat, bias)


# ----------------------------------------------------------------------------
# Stage 2: fused conv3x3/s2/p1 + bias + ReLU.  Patch extraction happens inside
# the kernel: taps are built from a 2x2 phase-split block (plus a 1-row halo),
# so the wide intermediate activation is never expanded 9x in HBM.
# ----------------------------------------------------------------------------
def _conv3x3s2_bias_relu_kernel(xm_ref, xn_ref, w_ref, b_ref, o_ref):
    # xm: (1, TH, 4, Wo+1, C)   phase-split rows i*TH .. i*TH+TH-1
    # xn: (1, 1,  4, Wo+1, C)   phase-split row  i*TH+TH   (the +1 halo row)
    # w : (9, C, N) bf16 (BN scale folded) ; b: (1, N) f32 ; o: (1, TH, Wo, N)
    _, th, _, _, c = xm_ref.shape
    _, _, wo, n = o_ref.shape

    acc = jnp.zeros((th * wo, n), jnp.float32)
    for kh in range(3):
        for kw in range(3):
            p = (kh % 2) * 2 + (kw % 2)   # 2x2 phase index (row parity, col parity)
            dw = kw // 2                  # 0/1 column offset inside the phase
            if kh < 2:
                tap = xm_ref[0, :, p, dw:dw + wo, :]
            elif th > 1:
                tap = jnp.concatenate(
                    [xm_ref[0, 1:, p, dw:dw + wo, :],
                     xn_ref[0, :, p, dw:dw + wo, :]], axis=0)
            else:
                tap = xn_ref[0, :, p, dw:dw + wo, :]
            acc = acc + jnp.dot(tap.reshape(th * wo, c), w_ref[kh * 3 + kw],
                                preferred_element_type=jnp.float32)

    y = jnp.maximum(acc + b_ref[...], 0.0)
    o_ref[...] = y.reshape(1, th, wo, n).astype(o_ref.dtype)


def conv2_fused_bias_relu(x_nhwc_bf16, w9, bias, out_dtype):
    B, H, W, C = x_nhwc_bf16.shape
    assert H % 2 == 0 and W % 2 == 0
    Ho, Wo = H // 2, W // 2
    Wo1 = Wo + 1
    N = w9.shape[2]

    # Single space-to-depth pass (fuses with the previous stage's output in XLA):
    # (B, H+2, W+2, C) -> (B, Ho+1, 4, Wo+1, C), phase p = 2*(row parity)+col parity
    xp = jnp.pad(x_nhwc_bf16, ((0, 0), (1, 1), (1, 1), (0, 0)))
    xs = xp.reshape(B, Ho + 1, 2, Wo1, 2, C).transpose(0, 1, 2, 4, 3, 5)
    xs = xs.reshape(B, Ho + 1, 4, Wo1, C)

    th = _pick_row_block(Ho, Wo)
    grid = (B, Ho // th)
    return pl.pallas_call(
        _conv3x3s2_bias_relu_kernel,
        grid=grid,
        in_specs=[
            pl.BlockSpec((1, th, 4, Wo1, C), lambda b, i: (b, i, 0, 0, 0)),
            # 1-row halo: phase-split row i*th + th (re-reads ~1/th of the rows).
            pl.BlockSpec((1, 1, 4, Wo1, C), lambda b, i: (b, (i + 1) * th, 0, 0, 0)),
            pl.BlockSpec((9, C, N), lambda b, i: (0, 0, 0)),
            pl.BlockSpec((1, N), lambda b, i: (0, 0)),
        ],
        out_specs=pl.BlockSpec((1, th, Wo, N), lambda b, i: (b, i, 0, 0)),
        out_shape=jax.ShapeDtypeStruct((B, Ho, Wo, N), out_dtype),
        compiler_params=pltpu.CompilerParams(
            dimension_semantics=("parallel", "parallel")),
    )(xs, xs, w9, bias)


# ----------------------------------------------------------------------------
# PatchEmbed forward (NCHW in, NCHW out — matches the PyTorch contract).
# ----------------------------------------------------------------------------
def patch_embed_forward(params, x_nchw, *, out_channels):
    B, C, H, W = x_nchw.shape
    assert H % 4 == 0 and W % 4 == 0, "PatchEmbed expects H, W divisible by 4"
    # One NCHW->NHWC layout change at entry; bf16 cast happens BEFORE any
    # patch extraction so only bf16 bytes move through HBM afterwards.
    x = jnp.transpose(x_nchw, (0, 2, 3, 1)).astype(jnp.bfloat16)
    y1 = conv1_im2col_bias_relu(x, params['w1'], params['b1'],
                                out_dtype=jnp.bfloat16)        # (B, H/2, W/2, 128)
    y2 = conv2_fused_bias_relu(y1, params['w2'], params['b2'],
                               out_dtype=jnp.float32)          # (B, H/4, W/4, 128)
    # Exit transpose kept because the PyTorch module returns NCHW.  If the
    # downstream consumer accepts NHWC, return y2[..., :out_channels] directly
    # and save this HBM pass.
    return jnp.transpose(y2[..., :out_channels], (0, 3, 1, 2))


# ----------------------------------------------------------------------------
# Parameters: raw (PyTorch-style) init + folding/padding/casting for the kernels.
# ----------------------------------------------------------------------------
def init_raw_params(key, in_channels=3, in_dim=64, dim=96):
    ks = jax.random.split(key, 12)

    def conv_init(kw_, kb_, cin, cout):
        bound = 1.0 / math.sqrt(cin * 9)
        w = jax.random.uniform(kw_, (cout, cin, 3, 3), jnp.float32, -bound, bound)
        b = jax.random.uniform(kb_, (cout,), jnp.float32, -bound, bound)
        return w, b

    def bn_init(kg, kb, km, kv, c):
        gamma = jax.random.uniform(kg, (c,), jnp.float32, 0.5, 1.5)
        beta = jax.random.normal(kb, (c,), jnp.float32) * 0.1
        mean = jax.random.normal(km, (c,), jnp.float32) * 0.1
        var = jax.random.uniform(kv, (c,), jnp.float32, 0.5, 1.5)
        return gamma, beta, mean, var

    w1, b1 = conv_init(ks[0], ks[1], in_channels, in_dim)
    g1, be1, m1, v1 = bn_init(ks[2], ks[3], ks[4], ks[5], in_dim)
    w2, b2 = conv_init(ks[6], ks[7], in_dim, dim)
    g2, be2, m2, v2 = bn_init(ks[8], ks[9], ks[10], ks[11], dim)
    return dict(w1=w1, b1=b1, g1=g1, be1=be1, m1=m1, v1=v1,
                w2=w2, b2=b2, g2=g2, be2=be2, m2=m2, v2=v2)


def prepare_params(raw):
    """Fold BN scale into the weights, pad channels to 128 lanes, cast to bf16."""
    w1, b1, w2, b2 = raw['w1'], raw['b1'], raw['w2'], raw['b2']
    in_dim, cin = w1.shape[0], w1.shape[1]
    dim = w2.shape[0]

    s1 = raw['g1'] / jnp.sqrt(raw['v1'] + BN_EPS)
    bias1 = (b1 - raw['m1']) * s1 + raw['be1']
    s2 = raw['g2'] / jnp.sqrt(raw['v2'] + BN_EPS)
    bias2 = (b2 - raw['m2']) * s2 + raw['be2']

    n1p = _round_up(in_dim, LANES)
    n2p = _round_up(dim, LANES)

    # Stage 1: (Cout,Cin,kh,kw) -> (kh,kw,Cin,Cout) -> (9*Cin, Cout); fold scale.
    w1f = jnp.transpose(w1, (2, 3, 1, 0)).reshape(9 * cin, in_dim) * s1[None, :]
    w1f = jnp.pad(w1f, ((0, 0), (0, n1p - in_dim))).astype(jnp.bfloat16)
    b1p = jnp.pad(bias1, (0, n1p - in_dim)).astype(jnp.float32).reshape(1, n1p)

    # Stage 2: (Cout,Cin,kh,kw) -> (9, Cin, Cout); fold scale; pad Cin->n1p, Cout->n2p.
    w2f = jnp.transpose(w2, (2, 3, 1, 0)).reshape(9, in_dim, dim) * s2[None, None, :]
    w2f = jnp.pad(w2f, ((0, 0), (0, n1p - in_dim), (0, n2p - dim))).astype(jnp.bfloat16)
    b2p = jnp.pad(bias2, (0, n2p - dim)).astype(jnp.float32).reshape(1, n2p)

    return dict(w1=w1f, b1=b1p, w2=w2f, b2=b2p)


# ----------------------------------------------------------------------------
# Pure-JAX f32 reference (mirrors the PyTorch module) for a tolerance check.
# ----------------------------------------------------------------------------
def reference_forward(raw, x):
    def stage(xx, w, b, g, be, m, v):
        y = lax.conv_general_dilated(
            xx, w, window_strides=(2, 2), padding=((1, 1), (1, 1)),
            dimension_numbers=('NCHW', 'OIHW', 'NCHW'))
        y = y + b[None, :, None, None]
        y = (y - m[None, :, None, None]) \
            * (g / jnp.sqrt(v + BN_EPS))[None, :, None, None] \
            + be[None, :, None, None]
        return jnp.maximum(y, 0.0)

    y = stage(x, raw['w1'], raw['b1'], raw['g1'], raw['be1'], raw['m1'], raw['v1'])
    return stage(y, raw['w2'], raw['b2'], raw['g2'], raw['be2'], raw['m2'], raw['v2'])


# ----------------------------------------------------------------------------
if __name__ == "__main__":
    B, Cin, H, W = 2, 3, 16, 16
    in_dim, dim = 64, 96                      # nn.Module defaults

    key = jax.random.PRNGKey(0)
    kp, kx = jax.random.split(key)
    raw = init_raw_params(kp, in_channels=Cin, in_dim=in_dim, dim=dim)
    params = prepare_params(raw)
    x = jax.random.normal(kx, (B, Cin, H, W), jnp.float32)

    fwd = jax.jit(functools.partial(patch_embed_forward, out_channels=dim))
    out = fwd(params, x)
    jax.block_until_ready(out)

    assert out.shape == (B, dim, H // 4, W // 4), out.shape
    assert out.dtype == jnp.float32
    assert bool(jnp.all(out >= 0.0))          # ReLU epilogue

    ref = reference_forward(raw, x)
    rel = float(jnp.linalg.norm(out - ref) / (jnp.linalg.norm(ref) + 1e-12))
    assert rel < 3e-2, f"relative L2 error too large: {rel}"

    print("KERNEL_OK")
</pallas_src>

<mosaic_0001>
module attributes {stable_mosaic.version = 11 : i64} {
  func.func @_mm_bias_relu_kernel(%arg0: i32, %arg1: i32, %arg2: memref<1x8x8x27xbf16, #tpu.memory_space<vmem>>, %arg3: memref<27x128xbf16, #tpu.memory_space<vmem>>, %arg4: memref<1x128xf32, #tpu.memory_space<vmem>>, %arg5: memref<1x8x8x128xbf16, #tpu.memory_space<vmem>>) attributes {dimension_semantics = [#tpu.dimension_semantics<parallel>, #tpu.dimension_semantics<parallel>], iteration_bounds = array<i64: 2, 1>, scalar_prefetch = 0 : i64, scratch_operands = 0 : i64, tpu.core_type = #tpu.core_type<tc>, window_params = [{transform_indices = @transform_0, window_bounds = array<i64: 1, 8, 8, 27>}, {pipeline_mode = #tpu.pipeline_mode<synchronous>, transform_indices = @transform_1, window_bounds = array<i64: 27, 128>}, {pipeline_mode = #tpu.pipeline_mode<synchronous>, transform_indices = @transform_2, window_bounds = array<i64: 1, 128>}, {transform_indices = @transform_3, window_bounds = array<i64: 1, 8, 8, 128>}]} {
    %c0 = arith.constant 0 : index
    %c0_0 = arith.constant 0 : index
    %c0_1 = arith.constant 0 : index
    %c0_2 = arith.constant 0 : index
    %0 = vector.load %arg2[%c0, %c0_0, %c0_1, %c0_2] : memref<1x8x8x27xbf16, #tpu.memory_space<vmem>>, vector<1x8x8x27xbf16>
    %1 = vector.shape_cast %0 : vector<1x8x8x27xbf16> to vector<64x27xbf16>
    %c0_3 = arith.constant 0 : index
    %c0_4 = arith.constant 0 : index
    %2 = vector.load %arg3[%c0_3, %c0_4] : memref<27x128xbf16, #tpu.memory_space<vmem>>, vector<27x128xbf16>
    %cst = arith.constant dense<0.000000e+00> : vector<64x128xf32>
    %3 = tpu.matmul %1, %2, %cst {dimension_numbers = #tpu.dot_dimension_numbers<[1], [0], [0], [1], [0, 0, 1, 1], [], []>} : vector<64x27xbf16>, vector<27x128xbf16>, vector<64x128xf32> -> vector<64x128xf32>
    %c0_5 = arith.constant 0 : index
    %c0_6 = arith.constant 0 : index
    %4 = vector.load %arg4[%c0_5, %c0_6] : memref<1x128xf32, #tpu.memory_space<vmem>>, vector<1x128xf32>
    %5 = vector.broadcast %4 : vector<1x128xf32> to vector<64x128xf32>
    %6 = arith.addf %3, %5 : vector<64x128xf32>
    %cst_7 = arith.constant 0.000000e+00 : f32
    %7 = vector.broadcast %cst_7 : f32 to vector<64x128xf32>
    %8 = arith.maximumf %6, %7 : vector<64x128xf32>
    %9 = vector.shape_cast %8 : vector<64x128xf32> to vector<1x8x8x128xf32>
    %10 = arith.truncf %9 : vector<1x8x8x128xf32> to vector<1x8x8x128xbf16>
    %c0_8 = arith.constant 0 : index
    %c0_9 = arith.constant 0 : index
    %c0_10 = arith.constant 0 : index
    %c0_11 = arith.constant 0 : index
    %11 = vector.load %arg5[%c0_8, %c0_9, %c0_10, %c0_11] : memref<1x8x8x128xbf16, #tpu.memory_space<vmem>>, vector<1x8x8x128xbf16>
    tpu.vector_store %arg5[%c0_8, %c0_9, %c0_10, %c0_11], %10 {strides = array<i32>} : memref<1x8x8x128xbf16, #tpu.memory_space<vmem>>, vector<1x8x8x128xbf16>,
    return
  }
  func.func @transform_0(%arg0: i32, %arg1: i32) -> (i32, i32, i32, i32) {
    %c0_i32 = arith.constant 0 : i32
    %c0_i32_0 = arith.constant 0 : i32
    %c0_i32_1 = arith.constant 0 : i32
    return %arg0, %arg1, %c0_i32, %c0_i32_0 : i32, i32, i32, i32
  }
  func.func @transform_1(%arg0: i32, %arg1: i32) -> (i32, i32) {
    %c0_i32 = arith.constant 0 : i32
    %c0_i32_0 = arith.constant 0 : i32
    %c0_i32_1 = arith.constant 0 : i32
    return %c0_i32, %c0_i32_0 : i32, i32
  }
  func.func @transform_2(%arg0: i32, %arg1: i32) -> (i32, i32) {
    %c0_i32 = arith.constant 0 : i32
    %c0_i32_0 = arith.constant 0 : i32
    %c0_i32_1 = arith.constant 0 : i32
    return %c0_i32, %c0_i32_0 : i32, i32
  }
  func.func @transform_3(%arg0: i32, %arg1: i32) -> (i32, i32, i32, i32) {
    %c0_i32 = arith.constant 0 : i32
    %c0_i32_0 = arith.constant 0 : i32
    %c0_i32_1 = arith.constant 0 : i32
    return %arg0, %arg1, %c0_i32, %c0_i32_0 : i32, i32, i32, i32
  }
}

module attributes {stable_mosaic.version = 11 : i64} {
  func.func @_conv3x3s2_bias_relu_kernel(%arg0: i32, %arg1: i32, %arg2: memref<1x4x4x5x128xbf16, #tpu.memory_space<vmem>>, %arg3: memref<1x1x4x5x128xbf16, #tpu.memory_space<vmem>>, %arg4: memref<9x128x128xbf16, #tpu.memory_space<vmem>>, %arg5: memref<1x128xf32, #tpu.memory_space<vmem>>, %arg6: memref<1x4x4x128xf32, #tpu.memory_space<vmem>>) attributes {dimension_semantics = [#tpu.dimension_semantics<parallel>, #tpu.dimension_semantics<parallel>], iteration_bounds = array<i64: 2, 1>, scalar_prefetch = 0 : i64, scratch_operands = 0 : i64, tpu.core_type = #tpu.core_type<tc>, window_params = [{transform_indices = @transform_0, window_bounds = array<i64: 1, 4, 4, 5, 128>}, {transform_indices = @transform_1, window_bounds = array<i64: 1, 1, 4, 5, 128>}, {pipeline_mode = #tpu.pipeline_mode<synchronous>, transform_indices = @transform_2, window_bounds = array<i64: 9, 128, 128>}, {pipeline_mode = #tpu.pipeline_mode<synchronous>, transform_indices = @transform_3, window_bounds = array<i64: 1, 128>}, {transform_indices = @transform_4, window_bounds = array<i64: 1, 4, 4, 128>}]} {
    %cst = arith.constant 0.000000e+00 : f32
    %0 = vector.broadcast %cst : f32 to vector<16x128xf32>
    %c0 = arith.constant 0 : index
    %c0_0 = arith.constant 0 : index
    %c0_1 = arith.constant 0 : index
    %c0_2 = arith.constant 0 : index
    %c0_3 = arith.constant 0 : index
    %1 = vector.load %arg2[%c0, %c0_0, %c0_1, %c0_2, %c0_3] : memref<1x4x4x5x128xbf16, #tpu.memory_space<vmem>>, vector<1x4x1x4x128xbf16>
    %2 = vector.shape_cast %1 : vector<1x4x1x4x128xbf16> to vector<4x4x128xbf16>
    %3 = vector.shape_cast %2 : vector<4x4x128xbf16> to vector<16x128xbf16>
    %c0_4 = arith.constant 0 : index
    %c0_5 = arith.constant 0 : index
    %c0_6 = arith.constant 0 : index
    %4 = vector.load %arg4[%c0_4, %c0_5, %c0_6] : memref<9x128x128xbf16, #tpu.memory_space<vmem>>, vector<1x128x128xbf16>
    %5 = vector.shape_cast %4 : vector<1x128x128xbf16> to vector<128x128xbf16>
    %cst_7 = arith.constant dense<0.000000e+00> : vector<16x128xf32>
    %6 = tpu.matmul %3, %5, %cst_7 {dimension_numbers = #tpu.dot_dimension_numbers<[1], [0], [0], [1], [0, 0, 1, 1], [], []>} : vector<16x128xbf16>, vector<128x128xbf16>, vector<16x128xf32> -> vector<16x128xf32>
    %7 = arith.addf %0, %6 : vector<16x128xf32>
    %c0_8 = arith.constant 0 : index
    %c0_9 = arith.constant 0 : index
    %c1 = arith.constant 1 : index
    %c0_10 = arith.constant 0 : index
    %c0_11 = arith.constant 0 : index
    %8 = vector.load %arg2[%c0_8, %c0_9, %c1, %c0_10, %c0_11] : memref<1x4x4x5x128xbf16, #tpu.memory_space<vmem>>, vector<1x4x1x4x128xbf16>
    %9 = vector.shape_cast %8 : vector<1x4x1x4x128xbf16> to vector<4x4x128xbf16>
    %10 = vector.shape_cast %9 : vector<4x4x128xbf16> to vector<16x128xbf16>
    %c1_12 = arith.constant 1 : index
    %c0_13 = arith.constant 0 : index
    %c0_14 = arith.constant 0 : index
    %11 = vector.load %arg4[%c1_12, %c0_13, %c0_14] : memref<9x128x128xbf16, #tpu.memory_space<vmem>>, vector<1x128x128xbf16>
    %12 = vector.shape_cast %11 : vector<1x128x128xbf16> to vector<128x128xbf16>
    %cst_15 = arith.constant dense<0.000000e+00> : vector<16x128xf32>
    %13 = tpu.matmul %10, %12, %cst_15 {dimension_numbers = #tpu.dot_dimension_numbers<[1], [0], [0], [1], [0, 0, 1, 1], [], []>} : vector<16x128xbf16>, vector<128x128xbf16>, vector<16x128xf32> -> vector<16x128xf32>
    %14 = arith.addf %7, %13 : vector<16x128xf32>
    %c0_16 = arith.constant 0 : index
    %c0_17 = arith.constant 0 : index
    %c0_18 = arith.constant 0 : index
    %c1_19 = arith.constant 1 : index
    %c0_20 = arith.constant 0 : index
    %15 = vector.load %arg2[%c0_16, %c0_17, %c0_18, %c1_19, %c0_20] : memref<1x4x4x5x128xbf16, #tpu.memory_space<vmem>>, vector<1x4x1x4x128xbf16>
    %16 = vector.shape_cast %15 : vector<1x4x1x4x128xbf16> to vector<4x4x128xbf16>
    %17 = vector.shape_cast %16 : vector<4x4x128xbf16> to vector<16x128xbf16>
    %c2 = arith.constant 2 : index
    %c0_21 = arith.constant 0 : index
    %c0_22 = arith.constant 0 : index
    %18 = vector.load %arg4[%c2, %c0_21, %c0_22] : memref<9x128x128xbf16, #tpu.memory_space<vmem>>, vector<1x128x128xbf16>
    %19 = vector.shape_cast %18 : vector<1x128x128xbf16> to vector<128x128xbf16>
    %cst_23 = arith.constant dense<0.000000e+00> : vector<16x128xf32>
    %20 = tpu.matmul %17, %19, %cst_23 {dimension_numbers = #tpu.dot_dimension_numbers<[1], [0], [0], [1], [0, 0, 1, 1], [], []>} : vector<16x128xbf16>, vector<128x128xbf16>, vector<16x128xf32> -> vector<16x128xf32>
    %21 = arith.addf %14, %20 : vector<16x128xf32>
    %c0_24 = arith.constant 0 : index
    %c0_25 = arith.constant 0 : index
    %c2_26 = arith.constant 2 : index
    %c0_27 = arith.constant 0 : index
    %c0_28 = arith.constant 0 : index
    %22 = vector.load %arg2[%c0_24, %c0_25, %c2_26, %c0_27, %c0_28] : memref<1x4x4x5x128xbf16, #tpu.memory_space<vmem>>, vector<1x4x1x4x128xbf16>
    %23 = vector.shape_cast %22 : vector<1x4x1x4x128xbf16> to vector<4x4x128xbf16>
    %24 = vector.shape_cast %23 : vector<4x4x128xbf16> to vector<16x128xbf16>
    %c3 = arith.constant 3 : index
    %c0_29 = arith.constant 0 : index
    %c0_30 = arith.constant 0 : index
    %25 = vector.load %arg4[%c3, %c0_29, %c0_30] : memref<9x128x128xbf16, #tpu.memory_space<vmem>>, vector<1x128x128xbf16>
    %26 = vector.shape_cast %25 : vector<1x128x128xbf16> to vector<128x128xbf16>
    %cst_31 = arith.constant dense<0.000000e+00> : vector<16x128xf32>
    %27 = tpu.matmul %24, %26, %cst_31 {dimension_numbers = #tpu.dot_dimension_numbers<[1], [0], [0], [1], [0, 0, 1, 1], [], []>} : vector<16x128xbf16>, vector<128x128xbf16>, vector<16x128xf32> -> vector<16x128xf32>
    %28 = arith.addf %21, %27 : vector<16x128xf32>
    %c0_32 = arith.constant 0 : index
    %c0_33 = arith.constant 0 : index
    %c3_34 = arith.constant 3 : index
    %c0_35 = arith.constant 0 : index
    %c0_36 = arith.constant 0 : index
    %29 = vector.load %arg2[%c0_32, %c0_33, %c3_34, %c0_35, %c0_36] : memref<1x4x4x5x128xbf16, #tpu.memory_space<vmem>>, vector<1x4x1x4x128xbf16>
    %30 = vector.shape_cast %29 : vector<1x4x1x4x128xbf16> to vector<4x4x128xbf16>
    %31 = vector.shape_cast %30 : vector<4x4x128xbf16> to vector<16x128xbf16>
    %c4 = arith.constant 4 : index
    %c0_37 = arith.constant 0 : index
    %c0_38 = arith.constant 0 : index
    %32 = vector.load %arg4[%c4, %c0_37, %c0_38] : memref<9x128x128xbf16, #tpu.memory_space<vmem>>, vector<1x128x128xbf16>
    %33 = vector.shape_cast %32 : vector<1x128x128xbf16> to vector<128x128xbf16>
    %cst_39 = arith.constant dense<0.000000e+00> : vector<16x128xf32>
    %34 = tpu.matmul %31, %33, %cst_39 {dimension_numbers = #tpu.dot_dimension_numbers<[1], [0], [0], [1], [0, 0, 1, 1], [], []>} : vector<16x128xbf16>, vector<128x128xbf16>, vector<16x128xf32> -> vector<16x128xf32>
    %35 = arith.addf %28, %34 : vector<16x128xf32>
    %c0_40 = arith.constant 0 : index
    %c0_41 = arith.constant 0 : index
    %c2_42 = arith.constant 2 : index
    %c1_43 = arith.constant 1 : index
    %c0_44 = arith.constant 0 : index
    %36 = vector.load %arg2[%c0_40, %c0_41, %c2_42, %c1_43, %c0_44] : memref<1x4x4x5x128xbf16, #tpu.memory_space<vmem>>, vector<1x4x1x4x128xbf16>
    %37 = vector.shape_cast %36 : vector<1x4x1x4x128xbf16> to vector<4x4x128xbf16>
    %38 = vector.shape_cast %37 : vector<4x4x128xbf16> to vector<16x128xbf16>
    %c5 = arith.constant 5 : index
    %c0_45 = arith.constant 0 : index
    %c0_46 = arith.constant 0 : index
    %39 = vector.load %arg4[%c5, %c0_45, %c0_46] : memref<9x128x128xbf16, #tpu.memory_space<vmem>>, vector<1x128x128xbf16>
    %40 = vector.shape_cast %39 : vector<1x128x128xbf16> to vector<128x128xbf16>
    %cst_47 = arith.constant dense<0.000000e+00> : vector<16x128xf32>
    %41 = tpu.matmul %38, %40, %cst_47 {dimension_numbers = #tpu.dot_dimension_numbers<[1], [0], [0], [1], [0, 0, 1, 1], [], []>} : vector<16x128xbf16>, vector<128x128xbf16>, vector<16x128xf32> -> vector<16x128xf32>
    %42 = arith.addf %35, %41 : vector<16x128xf32>
    %c0_48 = arith.constant 0 : index
    %c1_49 = arith.constant 1 : index
    %c0_50 = arith.constant 0 : index
    %c0_51 = arith.constant 0 : index
    %c0_52 = arith.constant 0 : index
    %43 = vector.load %arg2[%c0_48, %c1_49, %c0_50, %c0_51, %c0_52] : memref<1x4x4x5x128xbf16, #tpu.memory_space<vmem>>, vector<1x3x1x4x128xbf16>
    %44 = vector.shape_cast %43 : vector<1x3x1x4x128xbf16> to vector<3x4x128xbf16>
    %c0_53 = arith.constant 0 : index
    %c0_54 = arith.constant 0 : index
    %c0_55 = arith.constant 0 : index
    %c0_56 = arith.constant 0 : index
    %c0_57 = arith.constant 0 : index
    %45 = vector.load %arg3[%c0_53, %c0_54, %c0_55, %c0_56, %c0_57] : memref<1x1x4x5x128xbf16, #tpu.memory_space<vmem>>, vector<1x1x1x4x128xbf16>
    %46 = vector.shape_cast %45 : vector<1x1x1x4x128xbf16> to vector<1x4x128xbf16>
    %47 = tpu.concatenate %44, %46 in 0 : vector<3x4x128xbf16>, vector<1x4x128xbf16> -> vector<4x4x128xbf16>
    %48 = vector.shape_cast %47 : vector<4x4x128xbf16> to vector<16x128xbf16>
    %c6 = arith.constant 6 : index
    %c0_58 = arith.constant 0 : index
    %c0_59 = arith.constant 0 : index
    %49 = vector.load %arg4[%c6, %c0_58, %c0_59] : memref<9x128x128xbf16, #tpu.memory_space<vmem>>, vector<1x128x128xbf16>
    %50 = vector.shape_cast %49 : vector<1x128x128xbf16> to vector<128x128xbf16>
    %cst_60 = arith.constant dense<0.000000e+00> : vector<16x128xf32>
    %51 = tpu.matmul %48, %50, %cst_60 {dimension_numbers = #tpu.dot_dimension_numbers<[1], [0], [0], [1], [0, 0, 1, 1], [], []>} : vector<16x128xbf16>, vector<128x128xbf16>, vector<16x128xf32> -> vector<16x128xf32>
    %52 = arith.addf %42, %51 : vector<16x128xf32>
    %c0_61 = arith.constant 0 : index
    %c1_62 = arith.constant 1 : index
    %c1_63 = arith.constant 1 : index
    %c0_64 = arith.constant 0 : index
    %c0_65 = arith.constant 0 : index
    %53 = vector.load %arg2[%c0_61, %c1_62, %c1_63, %c0_64, %c0_65] : memref<1x4x4x5x128xbf16, #tpu.memory_space<vmem>>, vector<1x3x1x4x128xbf16>
    %54 = vector.shape_cast %53 : vector<1x3x1x4x128xbf16> to vector<3x4x128xbf16>
    %c0_66 = arith.constant 0 : index
    %c0_67 = arith.constant 0 : index
    %c1_68 = arith.constant 1 : index
    %c0_69 = arith.constant 0 : index
    %c0_70 = arith.constant 0 : index
    %55 = vector.load %arg3[%c0_66, %c0_67, %c1_68, %c0_69, %c0_70] : memref<1x1x4x5x128xbf16, #tpu.memory_space<vmem>>, vector<1x1x1x4x128xbf16>
    %56 = vector.shape_cast %55 : vector<1x1x1x4x128xbf16> to vector<1x4x128xbf16>
    %57 = tpu.concatenate %54, %56 in 0 : vector<3x4x128xbf16>, vector<1x4x128xbf16> -> vector<4x4x128xbf16>
    %58 = vector.shape_cast %57 : vector<4x4x128xbf16> to vector<16x128xbf16>
    %c7 = arith.constant 7 : index
    %c0_71 = arith.constant 0 : index
    %c0_72 = arith.constant 0 : index
    %59 = vector.load %arg4[%c7, %c0_71, %c0_72] : memref<9x128x128xbf16, #tpu.memory_space<vmem>>, vector<1x128x128xbf16>
    %60 = vector.shape_cast %59 : vector<1x128x128xbf16> to vector<128x128xbf16>
    %cst_73 = arith.constant dense<0.000000e+00> : vector<16x128xf32>
    %61 = tpu.matmul %58, %60, %cst_73 {dimension_numbers = #tpu.dot_dimension_numbers<[1], [0], [0], [1], [0, 0, 1, 1], [], []>} : vector<16x128xbf16>, vector<128x128xbf16>, vector<16x128xf32> -> vector<16x128xf32>
    %62 = arith.addf %52, %61 : vector<16x128xf32>
    %c0_74 = arith.constant 0 : index
    %c1_75 = arith.constant 1 : index
    %c0_76 = arith.constant 0 : index
    %c1_77 = arith.constant 1 : index
    %c0_78 = arith.constant 0 : index
    %63 = vector.load %arg2[%c0_74, %c1_75, %c0_76, %c1_77, %c0_78] : memref<1x4x4x5x128xbf16, #tpu.memory_space<vmem>>, vector<1x3x1x4x128xbf16>
    %64 = vector.shape_cast %63 : vector<1x3x1x4x128xbf16> to vector<3x4x128xbf16>
    %c0_79 = arith.constant 0 : index
    %c0_80 = arith.constant 0 : index
    %c0_81 = arith.constant 0 : index
    %c1_82 = arith.constant 1 : index
    %c0_83 = arith.constant 0 : index
    %65 = vector.load %arg3[%c0_79, %c0_80, %c0_81, %c1_82, %c0_83] : memref<1x1x4x5x128xbf16, #tpu.memory_space<vmem>>, vector<1x1x1x4x128xbf16>
    %66 = vector.shape_cast %65 : vector<1x1x1x4x128xbf16> to vector<1x4x128xbf16>
    %67 = tpu.concatenate %64, %66 in 0 : vector<3x4x128xbf16>, vector<1x4x128xbf16> -> vector<4x4x128xbf16>
    %68 = vector.shape_cast %67 : vector<4x4x128xbf16> to vector<16x128xbf16>
    %c8 = arith.constant 8 : index
    %c0_84 = arith.constant 0 : index
    %c0_85 = arith.constant 0 : index
    %69 = vector.load %arg4[%c8, %c0_84, %c0_85] : memref<9x128x128xbf16, #tpu.memory_space<vmem>>, vector<1x128x128xbf16>
    %70 = vector.shape_cast %69 : vector<1x128x128xbf16> to vector<128x128xbf16>
    %cst_86 = arith.constant dense<0.000000e+00> : vector<16x128xf32>
    %71 = tpu.matmul %68, %70, %cst_86 {dimension_numbers = #tpu.dot_dimension_numbers<[1], [0], [0], [1], [0, 0, 1, 1], [], []>} : vector<16x128xbf16>, vector<128x128xbf16>, vector<16x128xf32> -> vector<16x128xf32>
    %72 = arith.addf %62, %71 : vector<16x128xf32>
    %c0_87 = arith.constant 0 : index
    %c0_88 = arith.constant 0 : index
    %73 = vector.load %arg5[%c0_87, %c0_88] : memref<1x128xf32, #tpu.memory_space<vmem>>, vector<1x128xf32>
    %74 = vector.broadcast %73 : vector<1x128xf32> to vector<16x128xf32>
    %75 = arith.addf %72, %74 : vector<16x128xf32>
    %cst_89 = arith.constant 0.000000e+00 : f32
    %76 = vector.broadcast %cst_89 : f32 to vector<16x128xf32>
    %77 = arith.maximumf %75, %76 : vector<16x128xf32>
    %78 = vector.shape_cast %77 : vector<16x128xf32> to vector<1x4x4x128xf32>
    %c0_90 = arith.constant 0 : index
    %c0_91 = arith.constant 0 : index
    %c0_92 = arith.constant 0 : index
    %c0_93 = arith.constant 0 : index
    %79 = vector.load %arg6[%c0_90, %c0_91, %c0_92, %c0_93] : memref<1x4x4x128xf32, #tpu.memory_space<vmem>>, vector<1x4x4x128xf32>
    tpu.vector_store %arg6[%c0_90, %c0_91, %c0_92, %c0_93], %78 {strides = array<i32>} : memref<1x4x4x128xf32, #tpu.memory_space<vmem>>, vector<1x4x4x128xf32>,
    return
  }
  func.func @transform_0(%arg0: i32, %arg1: i32) -> (i32, i32, i32, i32, i32) {
    %c0_i32 = arith.constant 0 : i32
    %c0_i32_0 = arith.constant 0 : i32
    %c0_i32_1 = arith.constant 0 : i32
    %c0_i32_2 = arith.constant 0 : i32
    return %arg0, %arg1, %c0_i32, %c0_i32_0, %c0_i32_1 : i32, i32, i32, i32, i32
  }
  func.func @transform_1(%arg0: i32, %arg1: i32) -> (i32, i32, i32, i32, i32) {
    %c1_i32 = arith.constant 1 : i32
    %0 = arith.addi %arg1, %c1_i32 : i32
    %c4_i32 = arith.constant 4 : i32
    %1 = arith.muli %0, %c4_i32 : i32
    %c0_i32 = arith.constant 0 : i32
    %c0_i32_0 = arith.constant 0 : i32
    %c0_i32_1 = arith.constant 0 : i32
    %c0_i32_2 = arith.constant 0 : i32
    return %arg0, %1, %c0_i32, %c0_i32_0, %c0_i32_1 : i32, i32, i32, i32, i32
  }
  func.func @transform_2(%arg0: i32, %arg1: i32) -> (i32, i32, i32) {
    %c0_i32 = arith.constant 0 : i32
    %c0_i32_0 = arith.constant 0 : i32
    %c0_i32_1 = arith.constant 0 : i32
    %c0_i32_2 = arith.constant 0 : i32
    return %c0_i32, %c0_i32_0, %c0_i32_1 : i32, i32, i32
  }
  func.func @transform_3(%arg0: i32, %arg1: i32) -> (i32, i32) {
    %c0_i32 = arith.constant 0 : i32
    %c0_i32_0 = arith.constant 0 : i32
    %c0_i32_1 = arith.constant 0 : i32
    return %c0_i32, %c0_i32_0 : i32, i32
  }
  func.func @transform_4(%arg0: i32, %arg1: i32) -> (i32, i32, i32, i32) {
    %c0_i32 = arith.constant 0 : i32
    %c0_i32_0 = arith.constant 0 : i32
    %c0_i32_1 = arith.constant 0 : i32
    return %arg0, %arg1, %c0_i32, %c0_i32_0 : i32, i32, i32, i32
  }
}

</mosaic_0001>

<llo_original>
// kernel: patch_embed_forward.2
$region0: #{patch_embed_forward.2}
  #allocation0 [shape = 'u32[]', space=smem, size = 0x4, offset = 0x4, fixed_abs, tag = 'smem constant byte address 0x4 - core index']
  #allocation1 [shape = 'u32[144,128]{1,0:T(1,128)}', space=vmem, size = 0x12000, scoped, tag = 'internal scratch']
  %s0 = inlined_call_operand.vmem [shape: bf16[2,8,8,27], index: 0, kind: input, shape index: {}]
  %s1 = inlined_call_operand.vmem [shape: bf16[27,128], index: 1, kind: input, shape index: {}]
  %s2 = inlined_call_operand.vmem [shape: f32[1,128], index: 2, kind: input, shape index: {}]
  %s3 = inlined_call_operand.vmem [shape: bf16[2,8,8,128], index: 3, kind: output, shape index: {}]
  %s4 = sld [smem:[#allocation0]]
  $region45: #{patch_embed_forward.2} parent=0
    _
  %s6 = ssub.s32 1, %s4
  %s7 = scalar_select 0, %s6, %s4
  loop: start=0, step=1, limit=4
  $region2: #{patch_embed_forward.2} parent=0 // loop_pre_header
    _
  $region3: #{patch_embed_forward.2} parent=0 // loop_header
    %s9 = sphi 0, %s13
    %p10 = scmp.ge.s32.totalorder %s9, 4
    %s16 = sphi 0, %s28
    %s17 = sphi 0, %s24
    %s18 = sphi 0, %s16
    %s19 = sphi 0, %s17
    %s20 = sphi 0, %s18
    %s21 = sphi 0, %s19
    %s33 = sphi 0, %s35
    %s36 = sphi 0, %s33
    %s37 = sphi 0, %s36
    %s53 = sphi 0, %s37
    %s57 = sphi 0, %s57
    %s59 = sphi 0, %s57
    %s60 = sphi 0, %s59
    %s74 = sphi 0, %s60
    %s78 = sphi 0, %s78
    %s80 = sphi 0, %s78
    %s81 = sphi 0, %s80
    %s95 = sphi 0, %s81
    %s103 = sphi 0, %s105
    %s106 = sphi 0, %s103
    %s107 = sphi 0, %s106
    %s123 = sphi 0, %s107
  $region4: #{patch_embed_forward.2} parent=0 // loop_header_branch
    %12 = sbr.rel (%p10) target = $region8
  $region5: #{patch_embed_forward.2} parent=0 // loop_body
    %s14 = ssub.s32 %s9, 1
    %s15 = ssub.s32 %s9, 2
    %s22 = sadd.s32 1, %s17
    %p23 = scmp.ge.s32.totalorder %s22, 1
    %s24 = scalar_select %p23, 0, %s22
    %s25 = sadd.s32 1, %s16
    %s26 = scalar_select %p23, %s25, %s16
    %p27 = scmp.ge.s32.totalorder %s26, 2
    %s28 = scalar_select %p27, 0, %s26
    %s29 = ssub.s32 %s16, %s28
    %s30 = ssub.s32 %s17, %s24
    %s31 = sor.u32 %s29, %s30
    %p32 = scmp.eq.s32.totalorder %s31, 0
    %s34 = sadd.s32 %s33, 1
    %s35 = scalar_select %p32, %s33, %s34
    %p38 = pneg %p32
    %p39 = scmp.eq.s32.totalorder %s9, 1
    %p40 = por %p38, %p39
    %p41 = scmp.ne.s32.totalorder %s33, %s36
    %p42 = scmp.eq.s32.totalorder %s9, 0
    %p43 = por %p41, %p42
    %p44 = scmp.ne.s32.totalorder %s33, %s36
    %p45 = scmp.eq.s32.totalorder %s14, 1
    %p46 = por %p44, %p45
    %p47 = scmp.ne.s32.totalorder %s36, %s37
    %p48 = scmp.eq.s32.totalorder %s14, 0
    %p49 = por %p47, %p48
    %p50 = scmp.ne.s32.totalorder %s36, %s37
    %p51 = scmp.eq.s32.totalorder %s15, 1
    %p52 = por %p50, %p51
    %p54 = scmp.ne.s32.totalorder %s37, %s53
    %p55 = scmp.eq.s32.totalorder %s15, 0
    %p56 = por %p54, %p55
    %s58 = sadd.s32 %s57, 1
    %p61 = scmp.eq.s32.totalorder %s9, 1
    %p62 = scmp.ne.s32.totalorder %s57, %s59
    %p63 = scmp.eq.s32.totalorder %s9, 0
    %p64 = por %p62, %p63
    %p65 = scmp.ne.s32.totalorder %s57, %s59
    %p66 = scmp.eq.s32.totalorder %s14, 1
    %p67 = por %p65, %p66
    %p68 = scmp.ne.s32.totalorder %s59, %s60
    %p69 = scmp.eq.s32.totalorder %s14, 0
    %p70 = por %p68, %p69
    %p71 = scmp.ne.s32.totalorder %s59, %s60
    %p72 = scmp.eq.s32.totalorder %s15, 1
    %p73 = por %p71, %p72
    %p75 = scmp.ne.s32.totalorder %s60, %s74
    %p76 = scmp.eq.s32.totalorder %s15, 0
    %p77 = por %p75, %p76
    %s79 = sadd.s32 %s78, 1
    %p82 = scmp.eq.s32.totalorder %s9, 1
    %p83 = scmp.ne.s32.totalorder %s78, %s80
    %p84 = scmp.eq.s32.totalorder %s9, 0
    %p85 = por %p83, %p84
    %p86 = scmp.ne.s32.totalorder %s78, %s80
    %p87 = scmp.eq.s32.totalorder %s14, 1
    %p88 = por %p86, %p87
    %p89 = scmp.ne.s32.totalorder %s80, %s81
    %p90 = scmp.eq.s32.totalorder %s14, 0
    %p91 = por %p89, %p90
    %p92 = scmp.ne.s32.totalorder %s80, %s81
    %p93 = scmp.eq.s32.totalorder %s15, 1
    %p94 = por %p92, %p93
    %p96 = scmp.ne.s32.totalorder %s81, %s95
    %p97 = scmp.eq.s32.totalorder %s15, 0
    %p98 = por %p96, %p97
    %s99 = ssub.s32 %s16, %s28
    %s100 = ssub.s32 %s17, %s24
    %s101 = sor.u32 %s99, %s100
    %p102 = scmp.eq.s32.totalorder %s101, 0
    %s104 = sadd.s32 %s103, 1
    %s105 = scalar_select %p102, %s103, %s104
    %p108 = pneg %p102
    %p109 = scmp.eq.s32.totalorder %s9, 1
    %p110 = por %p108, %p109
    %p111 = scmp.ne.s32.totalorder %s103, %s106
    %p112 = scmp.eq.s32.totalorder %s9, 0
    %p113 = por %p111, %p112
    %p114 = scmp.ne.s32.totalorder %s103, %s106
    %p115 = scmp.eq.s32.totalorder %s14, 1
    %p116 = por %p114, %p115
    %p117 = scmp.ne.s32.totalorder %s106, %s107
    %p118 = scmp.eq.s32.totalorder %s14, 0
    %p119 = por %p117, %p118
    %p120 = scmp.ne.s32.totalorder %s106, %s107
    %p121 = scmp.eq.s32.totalorder %s15, 1
    %p122 = por %p120, %p121
    %p124 = scmp.ne.s32.totalorder %s107, %s123
    %p125 = scmp.eq.s32.totalorder %s15, 0
    %p126 = por %p124, %p125
    %p127 = scmp.le.s32.totalorder 1, %s9
    %p128 = scmp.lt.s32.totalorder %s9, 3
    %p129 = pnand %p127, %p128
    %p130 = pneg %p129
    // Predicated region
    $region9: #{patch_embed_forward.2} parent=5 // pred_check
      _
    $region10: #{patch_embed_forward.2} parent=5 // pred_check_branch
      %132 = sbr.rel (%p129) target = $region12
    $region11: #{patch_embed_forward.2} parent=5 // pred_region
      %s133 = ssub.s32 %s9, 1
      // Predicated region
      $region13: #{patch_embed_forward.2} parent=11 // pred_check
        %p134 = pneg %p70
      $region14: #{patch_embed_forward.2} parent=11 // pred_check_branch
        %136 = sbr.rel (%p134) target = $region16
      $region15: #{patch_embed_forward.2} parent=11 // pred_region
        _
      $region16: #{patch_embed_forward.2} parent=11 // pred_fallthru
        _
      // Predicated region
      $region17: #{patch_embed_forward.2} parent=11 // pred_check
        %p137 = pneg %p91
      $region18: #{patch_embed_forward.2} parent=11 // pred_check_branch
        %139 = sbr.rel (%p137) target = $region20
      $region19: #{patch_embed_forward.2} parent=11 // pred_region
        _
      $region20: #{patch_embed_forward.2} parent=11 // pred_fallthru
        _
    $region12: #{patch_embed_forward.2} parent=5 // pred_fallthru
      _
    %p140 = scmp.lt.s32.totalorder %s9, 2
    // Predicated region
    $region21: #{patch_embed_forward.2} parent=5 // pred_check
      %p141 = pneg %p140
    $region22: #{patch_embed_forward.2} parent=5 // pred_check_branch
      %143 = sbr.rel (%p141) target = $region24
    $region23: #{patch_embed_forward.2} parent=5 // pred_region
      // Predicated region
      $region25: #{patch_embed_forward.2} parent=23 // pred_check
        %p144 = pneg %p43
      $region26: #{patch_embed_forward.2} parent=23 // pred_check_branch
        %146 = sbr.rel (%p144) target = $region28
      $region27: #{patch_embed_forward.2} parent=23 // pred_region
        %s147 = smul.u32 8, %s17
        %p148 = scmp.lt.s32.totalorder %s16, 1
        %s149 = scalar_select %p148, %s16, 1
        %p150 = scmp.lt.s32.totalorder %s147, 7
        %s151 = scalar_select %p150, %s147, 7
        %s152 = smul.addr %s149, 8
        %s153 = sadd.s32 %s151, %s152
        %s154 = smul.addr %s153, 4
        %s155 = scalar_lea.vmem %s0, %s154
        %s156 = smul.u32 8, %s17
      $region28: #{patch_embed_forward.2} parent=23 // pred_fallthru
        _
    $region24: #{patch_embed_forward.2} parent=5 // pred_fallthru
      _
    %p157 = scmp.le.s32.totalorder 1, %s9
    %p158 = scmp.lt.s32.totalorder %s9, 3
    %p159 = pnand %p157, %p158
    %p160 = pneg %p159
    // Predicated region
    $region29: #{patch_embed_forward.2} parent=5 // pred_check
      _
    $region30: #{patch_embed_forward.2} parent=5 // pred_check_branch
      %162 = sbr.rel (%p159) target = $region32
    $region31: #{patch_embed_forward.2} parent=5 // pred_region
      %s163 = ssub.s32 %s9, 1
      %s164 = smul.u32 8, %s19
      %p165 = scmp.lt.s32.totalorder %s18, 1
      %s166 = scalar_select %p165, %s18, 1
      %p167 = scmp.lt.s32.totalorder %s164, 7
      %s168 = scalar_select %p167, %s164, 7
      %s169 = smul.addr %s166, 8
      %s170 = sadd.s32 %s168, %s169
      %s171 = smul.addr %s170, 4
      %s172 = scalar_lea.vmem %s0, %s171
      %p173 = pneg %p49
      %p174 = pneg %p46
      %p175 = pneg %p70
      %p176 = pneg %p67
      %p177 = pneg %p91
      %p178 = pneg %p88
      %p179 = pneg %p119
      %p180 = pneg %p116
      %s181 = smul.u32 8, %s19
      %p182 = scmp.lt.s32.totalorder %s18, 1
      %s183 = scalar_select %p182, %s18, 1
      %p184 = scmp.lt.s32.totalorder %s181, 7
      %s185 = scalar_select %p184, %s181, 7
      %s186 = smul.addr %s183, 8
      %s187 = sadd.s32 %s185, %s186
      %s188 = smul.addr %s187, 4
      %s189 = scalar_lea.vmem %s3, %s188
      %s190 = smul.u32 8, %s19
      %p191 = scmp.lt.s32.totalorder %s18, 1
      %s192 = scalar_select %p191, %s18, 1
      %p193 = scmp.lt.s32.totalorder %s190, 7
      %s194 = scalar_select %p193, %s190, 7
      %s195 = smul.addr %s192, 8
      %s196 = sadd.s32 %s194, %s195
      %s197 = smul.addr %s196, 4
      %s198 = scalar_lea.vmem %s0, %s197
      %s199 = smul.u32 8, %s19
      %s200 = smul.u32 8, %s19
      %p201 = scmp.lt.s32.totalorder %s18, 1
      %s202 = scalar_select %p201, %s18, 1
      %p203 = scmp.lt.s32.totalorder %s200, 7
      %s204 = scalar_select %p203, %s200, 7
      %s205 = smul.addr %s202, 8
      %s206 = sadd.s32 %s204, %s205
      %s207 = smul.addr %s206, 4
      %s208 = scalar_lea.vmem %s3, %s207
      %s209 = smul.u32 8, %s19
      %v211 = vld [vmem:[%s198] sm:$0xf]
      %v212 = vld [vmem:[%s198 + $0x4] sm:$0xf]
      %v213 = vld [vmem:[%s198 + $0x8] sm:$0xf]
      %v214 = vld [vmem:[%s198 + $0xc] sm:$0xf]
      %v215 = vld [vmem:[%s198 + $0x10] sm:$0xf]
      %v216 = vld [vmem:[%s198 + $0x14] sm:$0xf]
      %v217 = vld [vmem:[%s198 + $0x18] sm:$0xf]
      %v218 = vld [vmem:[%s198 + $0x1c] sm:$0xf]
      %v219 = vld [vmem:[%s1] sm:$0xf]
      %v220 = vld [vmem:[%s1 + $0x4] sm:$0xf]
      %v221 = vld [vmem:[%s1 + $0x8] sm:$0xf]
      %v222 = vld [vmem:[%s1 + $0xc] sm:$0x3]
      %v223 = vld [vmem:[%s2] sm:$0x1]
      %v225 = vlaneseq
      %v226 = vshrl.u32 %v225, 7
      %v227 = vsub.s32 0, %v226
      %v228 = vrot.slane %v223, %v227
      %v238 = vunpack.c.l.b16 %v211
      %v239 = vunpack.c.l.b16 %v212
      %v240 = vunpack.c.l.b16 %v213
      %v241 = vunpack.c.l.b16 %v214
      %v242 = vunpack.c.l.b16 %v215
      %v243 = vunpack.c.l.b16 %v216
      %v244 = vunpack.c.l.b16 %v217
      %v245 = vunpack.c.l.b16 %v218
      %v246 = vpack.c.b16 %v239, %v238
      %v247 = vpack.c.b16 %v241, %v240
      %v248 = vpack.c.b16 %v243, %v242
      %v249 = vpack.c.b16 %v245, %v244
      %v254 = vunpack.c.l.b16 %v219
      %v255 = vunpack.c.l.b16 %v220
      %v256 = vunpack.c.l.b16 %v221
      %v257 = vunpack.c.l.b16 %v222
      %v258 = vpack.c.b16 %v255, %v254
      %v259 = vpack.c.b16 %v257, %v256
      %vm261 = vcmask 220160
      %v263 = vsel %vm261, %v246, 0
      %v266 = vsel %vm261, %v247, 0
      %v269 = vsel %vm261, %v248, 0
      %v272 = vsel %vm261, %v249, 0
      %vm274 = vcmask 1044480
      %vm275 = vcmask 1045504
      %v276 = vsel %vm274, 4294967295, 65535
      %v277 = vsel %vm275, %v276, 0
      %v279 = vand.u32 %v259, %v277
      %281 = vmatprep.subr.bf16.mxu0 0
      %282 = vmatpush1.bf16.msra.mxu0 %v258
      %283 = vmatprep.subr.bf16.mxu0 0
      %284 = vmatpush1.bf16.msra.mxu0 %v279
      %285 = vmatprep.subr.bf16.mxu0 0
      %286 = vmatpush1.bf16.msra.mxu0 0
      %287 = vmatprep.subr.bf16.mxu0 0
      %288 = vmatpush1.bf16.msra.mxu0 0
      %289 = vmatprep.subr.bf16.mxu0 0
      %290 = vmatpush1.bf16.msra.mxu0 0
      %291 = vmatprep.subr.bf16.mxu0 0
      %292 = vmatpush1.bf16.msra.mxu0 0
      %293 = vmatprep.subr.bf16.mxu0 0
      %294 = vmatpush1.bf16.msra.mxu0 0
      %295 = vmatprep.subr.bf16.mxu0 0
      %296 = vmatpush1.bf16.msra.mxu0 0
      %297 = vmatprep.subr.bf16.mxu0 0
      %298 = vmatpush1.bf16.msra.mxu0 0
      %299 = vmatprep.subr.bf16.mxu0 0
      %300 = vmatpush1.bf16.msra.mxu0 0
      %301 = vmatprep.subr.bf16.mxu0 0
      %302 = vmatpush1.bf16.msra.mxu0 0
      %303 = vmatprep.subr.bf16.mxu0 0
      %304 = vmatpush1.bf16.msra.mxu0 0
      %305 = vmatprep.subr.bf16.mxu0 0
      %306 = vmatpush1.bf16.msra.mxu0 0
      %307 = vmatprep.subr.bf16.mxu0 0
      %308 = vmatpush1.bf16.msra.mxu0 0
      %309 = vmatprep.subr.bf16.mxu0 0
      %310 = vmatpush1.bf16.msra.mxu0 0
      %311 = vmatprep.subr.bf16.mxu0 0
      %312 = vmatpush1.bf16.msra.mxu0 0
      %313 = vmatprep.mubr.bf16.mxu0 0
      %314 = vmatmul.mubr.bf16.gmra.mrb[0].mxu0 %v263
      %v315 = vpop.f32.mrb[0].mxu0
      %v316 = vadd.f32 %v228, %v315
      %v317 = vpop.f32.mrb[0].mxu0
      %v318 = vpop.f32.mrb[0].mxu0
      %v319 = vadd.f32 %v228, %v318
      %v320 = vpop.f32.mrb[0].mxu0
      %321 = vmatprep.mubr.bf16.mxu0 0
      %322 = vmatmul.mubr.bf16.gmra.mrb[0].mxu0 %v266
      %v323 = vpop.f32.mrb[0].mxu0
      %v324 = vadd.f32 %v228, %v323
      %v325 = vpop.f32.mrb[0].mxu0
      %v326 = vpop.f32.mrb[0].mxu0
      %v327 = vadd.f32 %v228, %v326
      %v328 = vpop.f32.mrb[0].mxu0
      %329 = vmatprep.mubr.bf16.mxu0 0
      %330 = vmatmul.mubr.bf16.gmra.mrb[0].mxu0 %v269
      %v331 = vpop.f32.mrb[0].mxu0
      %v332 = vadd.f32 %v228, %v331
      %v333 = vpop.f32.mrb[0].mxu0
      %v334 = vpop.f32.mrb[0].mxu0
      %v335 = vadd.f32 %v228, %v334
      %v336 = vpop.f32.mrb[0].mxu0
      %337 = vmatprep.mubr.bf16.mxu0 0
      %338 = vmatmul.mubr.bf16.gmra.mrb[0].mxu0 %v272
      %v339 = vpop.f32.mrb[0].mxu0
      %v340 = vadd.f32 %v228, %v339
      %v341 = vpop.f32.mrb[0].mxu0
      %v342 = vpop.f32.mrb[0].mxu0
      %v343 = vadd.f32 %v228, %v342
      %v344 = vpop.f32.mrb[0].mxu0
      %345 = vdwg.mxu0
      %v346 = vmax.f32 %v316, 0.0
      %v347 = vmax.f32 %v319, 0.0
      %v348 = vmax.f32 %v324, 0.0
      %v349 = vmax.f32 %v327, 0.0
      %v350 = vmax.f32 %v332, 0.0
      %v351 = vmax.f32 %v335, 0.0
      %v352 = vmax.f32 %v340, 0.0
      %v353 = vmax.f32 %v343, 0.0
      %v354 = vpack.c.bf16 %v346, %v346
      %v355 = vpack.c.bf16 %v347, %v347
      %v356 = vpack.c.bf16 %v348, %v348
      %v357 = vpack.c.bf16 %v349, %v349
      %v358 = vpack.c.bf16 %v350, %v350
      %v359 = vpack.c.bf16 %v351, %v351
      %v360 = vpack.c.bf16 %v352, %v352
      %v361 = vpack.c.bf16 %v353, %v353
      %362 = vst [vmem:[%s208] sm:$0xf] %v354
      %363 = vst [vmem:[%s208 + $0x4] sm:$0xf] %v355
      %364 = vst [vmem:[%s208 + $0x8] sm:$0xf] %v356
      %365 = vst [vmem:[%s208 + $0xc] sm:$0xf] %v357
      %366 = vst [vmem:[%s208 + $0x10] sm:$0xf] %v358
      %367 = vst [vmem:[%s208 + $0x14] sm:$0xf] %v359
      %368 = vst [vmem:[%s208 + $0x18] sm:$0xf] %v360
      %369 = vst [vmem:[%s208 + $0x1c] sm:$0xf] %v361
      %s370 = smul.u32 8, %s19
      %p371 = scmp.lt.s32.totalorder %s18, 1
      %s372 = scalar_select %p371, %s18, 1
      %p373 = scmp.lt.s32.totalorder %s370, 7
      %s374 = scalar_select %p373, %s370, 7
      %s375 = smul.addr %s372, 8
      %s376 = sadd.s32 %s374, %s375
      %s377 = smul.addr %s376, 4
      %s378 = scalar_lea.vmem %s3, %s377
      // Predicated region
      $region33: #{patch_embed_forward.2} parent=31 // pred_check
        %p379 = pneg %p116
      $region34: #{patch_embed_forward.2} parent=31 // pred_check_branch
        %381 = sbr.rel (%p379) target = $region36
      $region35: #{patch_embed_forward.2} parent=31 // pred_region
        %s382 = smul.u32 8, %s19
      $region36: #{patch_embed_forward.2} parent=31 // pred_fallthru
        _
    $region32: #{patch_embed_forward.2} parent=5 // pred_fallthru
      _
    %p383 = scmp.le.s32.totalorder 2, %s9
    // Predicated region
    $region37: #{patch_embed_forward.2} parent=5 // pred_check
      %p384 = pneg %p383
    $region38: #{patch_embed_forward.2} parent=5 // pred_check_branch
      %386 = sbr.rel (%p384) target = $region40
    $region39: #{patch_embed_forward.2} parent=5 // pred_region
      %s387 = ssub.s32 %s9, 2
      // Predicated region
      $region41: #{patch_embed_forward.2} parent=39 // pred_check
        %p388 = pneg %p122
      $region42: #{patch_embed_forward.2} parent=39 // pred_check_branch
        %390 = sbr.rel (%p388) target = $region44
      $region43: #{patch_embed_forward.2} parent=39 // pred_region
        %s391 = smul.u32 8, %s21
        %p392 = scmp.lt.s32.totalorder %s20, 1
        %s393 = scalar_select %p392, %s20, 1
        %p394 = scmp.lt.s32.totalorder %s391, 7
        %s395 = scalar_select %p394, %s391, 7
        %s396 = smul.addr %s393, 8
        %s397 = sadd.s32 %s395, %s396
        %s398 = smul.addr %s397, 4
        %s399 = scalar_lea.vmem %s3, %s398
      $region44: #{patch_embed_forward.2} parent=39 // pred_fallthru
        _
    $region40: #{patch_embed_forward.2} parent=5 // pred_fallthru
      _
  $region6: #{patch_embed_forward.2} parent=0 // loop_footer
    %s13 = sadd.s32 1, %s9
  $region7: #{patch_embed_forward.2} parent=0 // loop_footer_branch
    %8 = sbr.rel target = $region3
  $region8: #{patch_embed_forward.2} parent=0 // loop_exit
    _

// kernel: patch_embed_forward.3
$region0: #{patch_embed_forward.3}
  #allocation0 [shape = 'u32[]', space=smem, size = 0x4, offset = 0x4, fixed_abs, tag = 'smem constant byte address 0x4 - core index']
  #allocation1 [shape = 'u32[144,128]{1,0:T(1,128)}', space=vmem, size = 0x12000, scoped, tag = 'internal scratch']
  %s0 = inlined_call_operand.vmem [shape: bf16[2,5,4,5,128], index: 0, kind: input, shape index: {}, may-alias: {0,1}]
  %s1 = inlined_call_operand.vmem [shape: bf16[2,5,4,5,128], index: 1, kind: input, shape index: {}, may-alias: {0,1}]
  %s2 = inlined_call_operand.vmem [shape: bf16[9,128,128], index: 2, kind: input, shape index: {}]
  %s3 = inlined_call_operand.vmem [shape: f32[1,128], index: 3, kind: input, shape index: {}]
  %s4 = inlined_call_operand.vmem [shape: f32[2,4,4,128], index: 4, kind: output, shape index: {}]
  %s5 = sld [smem:[#allocation0]]
  $region49: #{patch_embed_forward.3} parent=0
    _
  %s7 = ssub.s32 1, %s5
  %s8 = scalar_select 0, %s7, %s5
  loop: start=0, step=1, limit=4
  $region2: #{patch_embed_forward.3} parent=0 // loop_pre_header
    _
  $region3: #{patch_embed_forward.3} parent=0 // loop_header
    %s10 = sphi 0, %s14
    %p11 = scmp.ge.s32.totalorder %s10, 4
    %s17 = sphi 0, %s29
    %s18 = sphi 0, %s25
    %s19 = sphi 0, %s17
    %s20 = sphi 0, %s18
    %s21 = sphi 0, %s19
    %s22 = sphi 0, %s20
    %s34 = sphi 0, %s36
    %s37 = sphi 0, %s34
    %s38 = sphi 0, %s37
    %s54 = sphi 0, %s38
    %s66 = sphi 0, %s68
    %s69 = sphi 0, %s66
    %s70 = sphi 0, %s69
    %s86 = sphi 0, %s70
    %s90 = sphi 0, %s90
    %s92 = sphi 0, %s90
    %s93 = sphi 0, %s92
    %s107 = sphi 0, %s93
    %s111 = sphi 0, %s111
    %s113 = sphi 0, %s111
    %s114 = sphi 0, %s113
    %s128 = sphi 0, %s114
    %s136 = sphi 0, %s138
    %s139 = sphi 0, %s136
    %s140 = sphi 0, %s139
    %s156 = sphi 0, %s140
  $region4: #{patch_embed_forward.3} parent=0 // loop_header_branch
    %13 = sbr.rel (%p11) target = $region8
  $region5: #{patch_embed_forward.3} parent=0 // loop_body
    %s15 = ssub.s32 %s10, 1
    %s16 = ssub.s32 %s10, 2
    %s23 = sadd.s32 1, %s18
    %p24 = scmp.ge.s32.totalorder %s23, 1
    %s25 = scalar_select %p24, 0, %s23
    %s26 = sadd.s32 1, %s17
    %s27 = scalar_select %p24, %s26, %s17
    %p28 = scmp.ge.s32.totalorder %s27, 2
    %s29 = scalar_select %p28, 0, %s27
    %s30 = ssub.s32 %s17, %s29
    %s31 = ssub.s32 %s18, %s25
    %s32 = sor.u32 %s30, %s31
    %p33 = scmp.eq.s32.totalorder %s32, 0
    %s35 = sadd.s32 %s34, 1
    %s36 = scalar_select %p33, %s34, %s35
    %p39 = pneg %p33
    %p40 = scmp.eq.s32.totalorder %s10, 1
    %p41 = por %p39, %p40
    %p42 = scmp.ne.s32.totalorder %s34, %s37
    %p43 = scmp.eq.s32.totalorder %s10, 0
    %p44 = por %p42, %p43
    %p45 = scmp.ne.s32.totalorder %s34, %s37
    %p46 = scmp.eq.s32.totalorder %s15, 1
    %p47 = por %p45, %p46
    %p48 = scmp.ne.s32.totalorder %s37, %s38
    %p49 = scmp.eq.s32.totalorder %s15, 0
    %p50 = por %p48, %p49
    %p51 = scmp.ne.s32.totalorder %s37, %s38
    %p52 = scmp.eq.s32.totalorder %s16, 1
    %p53 = por %p51, %p52
    %p55 = scmp.ne.s32.totalorder %s38, %s54
    %p56 = scmp.eq.s32.totalorder %s16, 0
    %p57 = por %p55, %p56
    %s58 = sadd.s32 %s18, 1
    %s59 = smul.u32 %s58, 4
    %s60 = sadd.s32 %s25, 1
    %s61 = smul.u32 %s60, 4
    %s62 = ssub.s32 %s17, %s29
    %s63 = ssub.s32 %s59, %s61
    %s64 = sor.u32 %s62, %s63
    %p65 = scmp.eq.s32.totalorder %s64, 0
    %s67 = sadd.s32 %s66, 1
    %s68 = scalar_select %p65, %s66, %s67
    %p71 = pneg %p65
    %p72 = scmp.eq.s32.totalorder %s10, 1
    %p73 = por %p71, %p72
    %p74 = scmp.ne.s32.totalorder %s66, %s69
    %p75 = scmp.eq.s32.totalorder %s10, 0
    %p76 = por %p74, %p75
    %p77 = scmp.ne.s32.totalorder %s66, %s69
    %p78 = scmp.eq.s32.totalorder %s15, 1
    %p79 = por %p77, %p78
    %p80 = scmp.ne.s32.totalorder %s69, %s70
    %p81 = scmp.eq.s32.totalorder %s15, 0
    %p82 = por %p80, %p81
    %p83 = scmp.ne.s32.totalorder %s69, %s70
    %p84 = scmp.eq.s32.totalorder %s16, 1
    %p85 = por %p83, %p84
    %p87 = scmp.ne.s32.totalorder %s70, %s86
    %p88 = scmp.eq.s32.totalorder %s16, 0
    %p89 = por %p87, %p88
    %s91 = sadd.s32 %s90, 1
    %p94 = scmp.eq.s32.totalorder %s10, 1
    %p95 = scmp.ne.s32.totalorder %s90, %s92
    %p96 = scmp.eq.s32.totalorder %s10, 0
    %p97 = por %p95, %p96
    %p98 = scmp.ne.s32.totalorder %s90, %s92
    %p99 = scmp.eq.s32.totalorder %s15, 1
    %p100 = por %p98, %p99
    %p101 = scmp.ne.s32.totalorder %s92, %s93
    %p102 = scmp.eq.s32.totalorder %s15, 0
    %p103 = por %p101, %p102
    %p104 = scmp.ne.s32.totalorder %s92, %s93
    %p105 = scmp.eq.s32.totalorder %s16, 1
    %p106 = por %p104, %p105
    %p108 = scmp.ne.s32.totalorder %s93, %s107
    %p109 = scmp.eq.s32.totalorder %s16, 0
    %p110 = por %p108, %p109
    %s112 = sadd.s32 %s111, 1
    %p115 = scmp.eq.s32.totalorder %s10, 1
    %p116 = scmp.ne.s32.totalorder %s111, %s113
    %p117 = scmp.eq.s32.totalorder %s10, 0
    %p118 = por %p116, %p117
    %p119 = scmp.ne.s32.totalorder %s111, %s113
    %p120 = scmp.eq.s32.totalorder %s15, 1
    %p121 = por %p119, %p120
    %p122 = scmp.ne.s32.totalorder %s113, %s114
    %p123 = scmp.eq.s32.totalorder %s15, 0
    %p124 = por %p122, %p123
    %p125 = scmp.ne.s32.totalorder %s113, %s114
    %p126 = scmp.eq.s32.totalorder %s16, 1
    %p127 = por %p125, %p126
    %p129 = scmp.ne.s32.totalorder %s114, %s128
    %p130 = scmp.eq.s32.totalorder %s16, 0
    %p131 = por %p129, %p130
    %s132 = ssub.s32 %s17, %s29
    %s133 = ssub.s32 %s18, %s25
    %s134 = sor.u32 %s132, %s133
    %p135 = scmp.eq.s32.totalorder %s134, 0
    %s137 = sadd.s32 %s136, 1
    %s138 = scalar_select %p135, %s136, %s137
    %p141 = pneg %p135
    %p142 = scmp.eq.s32.totalorder %s10, 1
    %p143 = por %p141, %p142
    %p144 = scmp.ne.s32.totalorder %s136, %s139
    %p145 = scmp.eq.s32.totalorder %s10, 0
    %p146 = por %p144, %p145
    %p147 = scmp.ne.s32.totalorder %s136, %s139
    %p148 = scmp.eq.s32.totalorder %s15, 1
    %p149 = por %p147, %p148
    %p150 = scmp.ne.s32.totalorder %s139, %s140
    %p151 = scmp.eq.s32.totalorder %s15, 0
    %p152 = por %p150, %p151
    %p153 = scmp.ne.s32.totalorder %s139, %s140
    %p154 = scmp.eq.s32.totalorder %s16, 1
    %p155 = por %p153, %p154
    %p157 = scmp.ne.s32.totalorder %s140, %s156
    %p158 = scmp.eq.s32.totalorder %s16, 0
    %p159 = por %p157, %p158
    %p160 = scmp.le.s32.totalorder 1, %s10
    %p161 = scmp.lt.s32.totalorder %s10, 3
    %p162 = pnand %p160, %p161
    %p163 = pneg %p162
    // Predicated region
    $region9: #{patch_embed_forward.3} parent=5 // pred_check
      _
    $region10: #{patch_embed_forward.3} parent=5 // pred_check_branch
      %165 = sbr.rel (%p162) target = $region12
    $region11: #{patch_embed_forward.3} parent=5 // pred_region
      %s166 = ssub.s32 %s10, 1
      // Predicated region
      $region13: #{patch_embed_forward.3} parent=11 // pred_check
        %p167 = pneg %p103
      $region14: #{patch_embed_forward.3} parent=11 // pred_check_branch
        %169 = sbr.rel (%p167) target = $region16
      $region15: #{patch_embed_forward.3} parent=11 // pred_region
        _
      $region16: #{patch_embed_forward.3} parent=11 // pred_fallthru
        _
      // Predicated region
      $region17: #{patch_embed_forward.3} parent=11 // pred_check
        %p170 = pneg %p124
      $region18: #{patch_embed_forward.3} parent=11 // pred_check_branch
        %172 = sbr.rel (%p170) target = $region20
      $region19: #{patch_embed_forward.3} parent=11 // pred_region
        _
      $region20: #{patch_embed_forward.3} parent=11 // pred_fallthru
        _
    $region12: #{patch_embed_forward.3} parent=5 // pred_fallthru
      _
    %p173 = scmp.lt.s32.totalorder %s10, 2
    // Predicated region
    $region21: #{patch_embed_forward.3} parent=5 // pred_check
      %p174 = pneg %p173
    $region22: #{patch_embed_forward.3} parent=5 // pred_check_branch
      %176 = sbr.rel (%p174) target = $region24
    $region23: #{patch_embed_forward.3} parent=5 // pred_region
      // Predicated region
      $region25: #{patch_embed_forward.3} parent=23 // pred_check
        %p177 = pneg %p44
      $region26: #{patch_embed_forward.3} parent=23 // pred_check_branch
        %179 = sbr.rel (%p177) target = $region28
      $region27: #{patch_embed_forward.3} parent=23 // pred_region
        %s180 = smul.u32 4, %s18
        %s181 = ssub.s32 5, %s180
        %p182 = scmp.lt.s32.totalorder %s181, 4
        %s183 = scalar_select %p182, %s181, 4
        %s184 = smul.u32 64, %s183
        %s185 = smul.u32 %s184, 4
        %p186 = scmp.lt.s32.totalorder %s17, 1
        %s187 = scalar_select %p186, %s17, 1
        %p188 = scmp.lt.s32.totalorder %s180, 4
        %s189 = scalar_select %p188, %s180, 4
        %s190 = smul.addr %s189, 4
        %s191 = smul.addr %s187, 20
        %s192 = sadd.s32 %s190, %s191
        %s193 = smul.addr %s192, 4
        %s194 = scalar_lea.vmem %s0, %s193
        %s195 = smul.u32 4, %s18
        %s196 = ssub.s32 5, %s195
        %p197 = scmp.lt.s32.totalorder %s196, 4
        %s198 = scalar_select %p197, %s196, 4
        %s199 = smul.u32 64, %s198
        %s200 = smul.u32 %s199, 4
      $region28: #{patch_embed_forward.3} parent=23 // pred_fallthru
        _
      // Predicated region
      $region29: #{patch_embed_forward.3} parent=23 // pred_check
        %p201 = pneg %p76
      $region30: #{patch_embed_forward.3} parent=23 // pred_check_branch
        %203 = sbr.rel (%p201) target = $region32
      $region31: #{patch_embed_forward.3} parent=23 // pred_region
        %s204 = sadd.s32 %s18, 1
        %s205 = smul.u32 %s204, 4
        %p206 = scmp.lt.s32.totalorder %s17, 1
        %s207 = scalar_select %p206, %s17, 1
        %p208 = scmp.lt.s32.totalorder %s205, 4
        %s209 = scalar_select %p208, %s205, 4
        %s210 = smul.addr %s209, 4
        %s211 = smul.addr %s207, 20
        %s212 = sadd.s32 %s210, %s211
        %s213 = smul.addr %s212, 4
        %s214 = scalar_lea.vmem %s1, %s213
        %s215 = sadd.s32 %s18, 1
        %s216 = smul.u32 %s215, 4
      $region32: #{patch_embed_forward.3} parent=23 // pred_fallthru
        _
    $region24: #{patch_embed_forward.3} parent=5 // pred_fallthru
      _
    %p217 = scmp.le.s32.totalorder 1, %s10
    %p218 = scmp.lt.s32.totalorder %s10, 3
    %p219 = pnand %p217, %p218
    %p220 = pneg %p219
    // Predicated region
    $region33: #{patch_embed_forward.3} parent=5 // pred_check
      _
    $region34: #{patch_embed_forward.3} parent=5 // pred_check_branch
      %222 = sbr.rel (%p219) target = $region36
    $region35: #{patch_embed_forward.3} parent=5 // pred_region
      %s223 = ssub.s32 %s10, 1
      %s224 = smul.u32 4, %s20
      %s225 = ssub.s32 5, %s224
      %p226 = scmp.lt.s32.totalorder %s225, 4
      %s227 = scalar_select %p226, %s225, 4
      %s228 = smul.u32 64, %s227
      %s229 = smul.u32 %s228, 4
      %p230 = scmp.lt.s32.totalorder %s19, 1
      %s231 = scalar_select %p230, %s19, 1
      %p232 = scmp.lt.s32.totalorder %s224, 4
      %s233 = scalar_select %p232, %s224, 4
      %s234 = smul.addr %s233, 4
      %s235 = smul.addr %s231, 20
      %s236 = sadd.s32 %s234, %s235
      %s237 = smul.addr %s236, 4
      %s238 = scalar_lea.vmem %s0, %s237
      %p239 = pneg %p50
      %p240 = pneg %p47
      %s241 = sadd.s32 %s20, 1
      %s242 = smul.u32 %s241, 4
      %p243 = scmp.lt.s32.totalorder %s19, 1
      %s244 = scalar_select %p243, %s19, 1
      %p245 = scmp.lt.s32.totalorder %s242, 4
      %s246 = scalar_select %p245, %s242, 4
      %s247 = smul.addr %s246, 4
      %s248 = smul.addr %s244, 20
      %s249 = sadd.s32 %s247, %s248
      %s250 = smul.addr %s249, 4
      %s251 = scalar_lea.vmem %s1, %s250
      %p252 = pneg %p82
      %p253 = pneg %p79
      %p254 = pneg %p103
      %p255 = pneg %p100
      %p256 = pneg %p124
      %p257 = pneg %p121
      %p258 = pneg %p152
      %p259 = pneg %p149
      %s260 = smul.u32 4, %s20
      %p261 = scmp.lt.s32.totalorder %s19, 1
      %s262 = scalar_select %p261, %s19, 1
      %p263 = scmp.lt.s32.totalorder %s260, 3
      %s264 = scalar_select %p263, %s260, 3
      %s265 = smul.addr %s262, 4
      %s266 = sadd.s32 %s264, %s265
      %s267 = smul.addr %s266, 4
      %s268 = scalar_lea.vmem %s4, %s267
      %s269 = smul.u32 4, %s20
      %s270 = ssub.s32 5, %s269
      %p271 = scmp.lt.s32.totalorder %s270, 4
      %s272 = scalar_select %p271, %s270, 4
      %s273 = smul.u32 64, %s272
      %s274 = smul.u32 %s273, 4
      %p275 = scmp.lt.s32.totalorder %s19, 1
      %s276 = scalar_select %p275, %s19, 1
      %p277 = scmp.lt.s32.totalorder %s269, 4
      %s278 = scalar_select %p277, %s269, 4
      %s279 = smul.addr %s278, 4
      %s280 = smul.addr %s276, 20
      %s281 = sadd.s32 %s279, %s280
      %s282 = smul.addr %s281, 4
      %s283 = scalar_lea.vmem %s0, %s282
      %s284 = smul.u32 4, %s20
      %s285 = ssub.s32 5, %s284
      %p286 = scmp.lt.s32.totalorder %s285, 4
      %s287 = scalar_select %p286, %s285, 4
      %s288 = smul.u32 64, %s287
      %s289 = smul.u32 %s288, 4
      %s290 = sadd.s32 %s20, 1
      %s291 = smul.u32 %s290, 4
      %p292 = scmp.lt.s32.totalorder %s19, 1
      %s293 = scalar_select %p292, %s19, 1
      %p294 = scmp.lt.s32.totalorder %s291, 4
      %s295 = scalar_select %p294, %s291, 4
      %s296 = smul.addr %s295, 4
      %s297 = smul.addr %s293, 20
      %s298 = sadd.s32 %s296, %s297
      %s299 = smul.addr %s298, 4
      %s300 = scalar_lea.vmem %s1, %s299
      %s301 = sadd.s32 %s20, 1
      %s302 = smul.u32 %s301, 4
      %s303 = smul.u32 4, %s20
      %p304 = scmp.lt.s32.totalorder %s19, 1
      %s305 = scalar_select %p304, %s19, 1
      %p306 = scmp.lt.s32.totalorder %s303, 3
      %s307 = scalar_select %p306, %s303, 3
      %s308 = smul.addr %s305, 4
      %s309 = sadd.s32 %s307, %s308
      %s310 = smul.addr %s309, 4
      %s311 = scalar_lea.vmem %s4, %s310
      %s312 = smul.u32 4, %s20
      %v314 = vld [vmem:[%s283] sm:$0x3]
      %v315 = vld [vmem:[%s283 + $0x10] sm:$0x3]
      %v316 = vld [vmem:[%s283 + $0x20] sm:$0x3]
      %v317 = vld [vmem:[%s283 + $0x30] sm:$0x3]
      %v318 = vld [vmem:[%s2] sm:$0xf]
      %v319 = vld [vmem:[%s2 + $0x4] sm:$0xf]
      %v320 = vld [vmem:[%s2 + $0x8] sm:$0xf]
      %v321 = vld [vmem:[%s2 + $0xc] sm:$0xf]
      %v322 = vld [vmem:[%s2 + $0x10] sm:$0xf]
      %v323 = vld [vmem:[%s2 + $0x14] sm:$0xf]
      %v324 = vld [vmem:[%s2 + $0x18] sm:$0xf]
      %v325 = vld [vmem:[%s2 + $0x1c] sm:$0xf]
      %v326 = vld [vmem:[%s2 + $0x20] sm:$0xf]
      %v327 = vld [vmem:[%s2 + $0x24] sm:$0xf]
      %v328 = vld [vmem:[%s2 + $0x28] sm:$0xf]
      %v329 = vld [vmem:[%s2 + $0x2c] sm:$0xf]
      %v330 = vld [vmem:[%s2 + $0x30] sm:$0xf]
      %v331 = vld [vmem:[%s2 + $0x34] sm:$0xf]
      %v332 = vld [vmem:[%s2 + $0x38] sm:$0xf]
      %v333 = vld [vmem:[%s2 + $0x3c] sm:$0xf]
      %s334 = scalar_lea.vmem %s283, 4
      %v335 = vld [vmem:[%s334] sm:$0x3]
      %v336 = vld [vmem:[%s334 + $0x10] sm:$0x3]
      %v337 = vld [vmem:[%s334 + $0x20] sm:$0x3]
      %v338 = vld [vmem:[%s334 + $0x30] sm:$0x3]
      %s339 = scalar_lea.vmem %s2, 64
      %v340 = vld [vmem:[%s339] sm:$0xf]
      %v341 = vld [vmem:[%s339 + $0x4] sm:$0xf]
      %v342 = vld [vmem:[%s339 + $0x8] sm:$0xf]
      %v343 = vld [vmem:[%s339 + $0xc] sm:$0xf]
      %v344 = vld [vmem:[%s339 + $0x10] sm:$0xf]
      %v345 = vld [vmem:[%s339 + $0x14] sm:$0xf]
      %v346 = vld [vmem:[%s339 + $0x18] sm:$0xf]
      %v347 = vld [vmem:[%s339 + $0x1c] sm:$0xf]
      %v348 = vld [vmem:[%s339 + $0x20] sm:$0xf]
      %v349 = vld [vmem:[%s339 + $0x24] sm:$0xf]
      %v350 = vld [vmem:[%s339 + $0x28] sm:$0xf]
      %v351 = vld [vmem:[%s339 + $0x2c] sm:$0xf]
      %v352 = vld [vmem:[%s339 + $0x30] sm:$0xf]
      %v353 = vld [vmem:[%s339 + $0x34] sm:$0xf]
      %v354 = vld [vmem:[%s339 + $0x38] sm:$0xf]
      %v355 = vld [vmem:[%s339 + $0x3c] sm:$0xf]
      %v360 = vcombine.low %v335, %v336
      %v361 = vcombine.low %v337, %v338
      %v363 = vunpack.c.l.s4 1983009808
      %v364 = vunpack.c.0.s8 %v363
      %v365 = vlaneseq
      %v366 = vshrl.u32 %v365, 7
      %v367 = vsub.s32 %v364, %v366
      %v368 = vrot.slane %v360, %v367
      %v370 = vunpack.c.l.s4 1983009808
      %v371 = vunpack.c.0.s8 %v370
      %v372 = vlaneseq
      %v373 = vshrl.u32 %v372, 7
      %v374 = vsub.s32 %v371, %v373
      %v375 = vrot.slane %v361, %v374
      %v376 = vcombine.low %v368, %v375
      %v394 = vunpack.c.l.b16 %v340
      %v395 = vunpack.c.l.b16 %v341
      %v396 = vunpack.c.l.b16 %v342
      %v397 = vunpack.c.l.b16 %v343
      %v398 = vunpack.c.l.b16 %v344
      %v399 = vunpack.c.l.b16 %v345
      %v400 = vunpack.c.l.b16 %v346
      %v401 = vunpack.c.l.b16 %v347
      %v402 = vunpack.c.l.b16 %v348
      %v403 = vunpack.c.l.b16 %v349
      %v404 = vunpack.c.l.b16 %v350
      %v405 = vunpack.c.l.b16 %v351
      %v406 = vunpack.c.l.b16 %v352
      %v407 = vunpack.c.l.b16 %v353
      %v408 = vunpack.c.l.b16 %v354
      %v409 = vunpack.c.l.b16 %v355
      %v410 = vpack.c.b16 %v395, %v394
      %v411 = vpack.c.b16 %v397, %v396
      %v412 = vpack.c.b16 %v399, %v398
      %v413 = vpack.c.b16 %v401, %v400
      %v414 = vpack.c.b16 %v403, %v402
      %v415 = vpack.c.b16 %v405, %v404
      %v416 = vpack.c.b16 %v407, %v406
      %v417 = vpack.c.b16 %v409, %v408
      %426 = vmatprep.subr.bf16.mxu0 0
      %427 = vmatpush1.bf16.msra.mxu0 %v410
      %428 = vmatprep.subr.bf16.mxu0 0
      %429 = vmatpush1.bf16.msra.mxu0 %v411
      %430 = vmatprep.subr.bf16.mxu0 0
      %431 = vmatpush1.bf16.msra.mxu0 %v412
      %432 = vmatprep.subr.bf16.mxu0 0
      %433 = vmatpush1.bf16.msra.mxu0 %v413
      %434 = vmatprep.subr.bf16.mxu0 0
      %435 = vmatpush1.bf16.msra.mxu0 %v414
      %436 = vmatprep.subr.bf16.mxu0 0
      %437 = vmatpush1.bf16.msra.mxu0 %v415
      %438 = vmatprep.subr.bf16.mxu0 0
      %439 = vmatpush1.bf16.msra.mxu0 %v416
      %440 = vmatprep.subr.bf16.mxu0 0
      %441 = vmatpush1.bf16.msra.mxu0 %v417
      %442 = vmatprep.subr.bf16.mxu0 0
      %443 = vmatpush1.bf16.msra.mxu0 0
      %444 = vmatprep.subr.bf16.mxu0 0
      %445 = vmatpush1.bf16.msra.mxu0 0
      %446 = vmatprep.subr.bf16.mxu0 0
      %447 = vmatpush1.bf16.msra.mxu0 0
      %448 = vmatprep.subr.bf16.mxu0 0
      %449 = vmatpush1.bf16.msra.mxu0 0
      %450 = vmatprep.subr.bf16.mxu0 0
      %451 = vmatpush1.bf16.msra.mxu0 0
      %452 = vmatprep.subr.bf16.mxu0 0
      %453 = vmatpush1.bf16.msra.mxu0 0
      %454 = vmatprep.subr.bf16.mxu0 0
      %455 = vmatpush1.bf16.msra.mxu0 0
      %456 = vmatprep.subr.bf16.mxu0 0
      %457 = vmatpush1.bf16.msra.mxu0 0
      %458 = vmatprep.mubr.bf16.mxu0 0
      %459 = vmatmul.mubr.bf16.gmra.mrb[0].mxu0 %v376
      %v460 = vpop.f32.mrb[0].mxu0
      %v461 = vadd.f32 0.0, %v460
      %v462 = vpop.f32.mrb[0].mxu0
      %v463 = vpop.f32.mrb[0].mxu0
      %v464 = vadd.f32 0.0, %v463
      %v465 = vpop.f32.mrb[0].mxu0
      %466 = vdwg.mxu0
      %v471 = vcombine.low %v314, %v315
      %v472 = vcombine.low %v316, %v317
      %v474 = vunpack.c.l.s4 1983009808
      %v475 = vunpack.c.0.s8 %v474
      %v476 = vlaneseq
      %v477 = vshrl.u32 %v476, 7
      %v478 = vsub.s32 %v475, %v477
      %v479 = vrot.slane %v471, %v478
      %v481 = vunpack.c.l.s4 1983009808
      %v482 = vunpack.c.0.s8 %v481
      %v483 = vlaneseq
      %v484 = vshrl.u32 %v483, 7
      %v485 = vsub.s32 %v482, %v484
      %v486 = vrot.slane %v472, %v485
      %v487 = vcombine.low %v479, %v486
      %v505 = vunpack.c.l.b16 %v318
      %v506 = vunpack.c.l.b16 %v319
      %v507 = vunpack.c.l.b16 %v320
      %v508 = vunpack.c.l.b16 %v321
      %v509 = vunpack.c.l.b16 %v322
      %v510 = vunpack.c.l.b16 %v323
      %v511 = vunpack.c.l.b16 %v324
      %v512 = vunpack.c.l.b16 %v325
      %v513 = vunpack.c.l.b16 %v326
      %v514 = vunpack.c.l.b16 %v327
      %v515 = vunpack.c.l.b16 %v328
      %v516 = vunpack.c.l.b16 %v329
      %v517 = vunpack.c.l.b16 %v330
      %v518 = vunpack.c.l.b16 %v331
      %v519 = vunpack.c.l.b16 %v332
      %v520 = vunpack.c.l.b16 %v333
      %v521 = vpack.c.b16 %v506, %v505
      %v522 = vpack.c.b16 %v508, %v507
      %v523 = vpack.c.b16 %v510, %v509
      %v524 = vpack.c.b16 %v512, %v511
      %v525 = vpack.c.b16 %v514, %v513
      %v526 = vpack.c.b16 %v516, %v515
      %v527 = vpack.c.b16 %v518, %v517
      %v528 = vpack.c.b16 %v520, %v519
      %537 = vmatprep.subr.bf16.mxu0 0
      %538 = vmatpush1.bf16.msra.mxu0 %v521
      %539 = vmatprep.subr.bf16.mxu0 0
      %540 = vmatpush1.bf16.msra.mxu0 %v522
      %541 = vmatprep.subr.bf16.mxu0 0
      %542 = vmatpush1.bf16.msra.mxu0 %v523
      %543 = vmatprep.subr.bf16.mxu0 0
      %544 = vmatpush1.bf16.msra.mxu0 %v524
      %545 = vmatprep.subr.bf16.mxu0 0
      %546 = vmatpush1.bf16.msra.mxu0 %v525
      %547 = vmatprep.subr.bf16.mxu0 0
      %548 = vmatpush1.bf16.msra.mxu0 %v526
      %549 = vmatprep.subr.bf16.mxu0 0
      %550 = vmatpush1.bf16.msra.mxu0 %v527
      %551 = vmatprep.subr.bf16.mxu0 0
      %552 = vmatpush1.bf16.msra.mxu0 %v528
      %553 = vmatprep.subr.bf16.mxu0 0
      %554 = vmatpush1.bf16.msra.mxu0 0
      %555 = vmatprep.subr.bf16.mxu0 0
      %556 = vmatpush1.bf16.msra.mxu0 0
      %557 = vmatprep.subr.bf16.mxu0 0
      %558 = vmatpush1.bf16.msra.mxu0 0
      %559 = vmatprep.subr.bf16.mxu0 0
      %560 = vmatpush1.bf16.msra.mxu0 0
      %561 = vmatprep.subr.bf16.mxu0 0
      %562 = vmatpush1.bf16.msra.mxu0 0
      %563 = vmatprep.subr.bf16.mxu0 0
      %564 = vmatpush1.bf16.msra.mxu0 0
      %565 = vmatprep.subr.bf16.mxu0 0
      %566 = vmatpush1.bf16.msra.mxu0 0
      %567 = vmatprep.subr.bf16.mxu0 0
      %568 = vmatpush1.bf16.msra.mxu0 0
      %569 = vmatprep.mubr.bf16.mxu0 0
      %570 = vmatmul.mubr.bf16.gmra.mrb[0].mxu0 %v487
      %v571 = vpop.f32.mrb[0].mxu0
      %v572 = vadd.f32 %v461, %v571
      %v573 = vpop.f32.mrb[0].mxu0
      %v574 = vpop.f32.mrb[0].mxu0
      %v575 = vadd.f32 %v464, %v574
      %v576 = vpop.f32.mrb[0].mxu0
      %577 = vdwg.mxu0
      %v578 = vld [vmem:[%s283] sm:$0x7]
      %v579 = vld [vmem:[%s283 + $0x10] sm:$0x7]
      %v580 = vld [vmem:[%s283 + $0x20] sm:$0x7]
      %v581 = vld [vmem:[%s283 + $0x30] sm:$0x7]
      %v587 = vunpack.c.l.s4 1983009808
      %v588 = vunpack.c.0.s8 %v587
      %v589 = vlaneseq
      %v590 = vshrl.u32 %v589, 7
      %v591 = vsub.s32 %v588, %v590
      %v592 = vrot.slane %v578, %v591
      %v593 = vcombine.high %v592, %v592
      %v595 = vunpack.c.l.s4 1983009808
      %v596 = vunpack.c.0.s8 %v595
      %v597 = vlaneseq
      %v598 = vshrl.u32 %v597, 7
      %v599 = vsub.s32 %v596, %v598
      %v600 = vrot.slane %v579, %v599
      %v601 = vcombine.high %v600, %v600
      %v603 = vunpack.c.l.s4 1983009808
      %v604 = vunpack.c.0.s8 %v603
      %v605 = vlaneseq
      %v606 = vshrl.u32 %v605, 7
      %v607 = vsub.s32 %v604, %v606
      %v608 = vrot.slane %v580, %v607
      %v609 = vcombine.high %v608, %v608
      %v611 = vunpack.c.l.s4 1983009808
      %v612 = vunpack.c.0.s8 %v611
      %v613 = vlaneseq
      %v614 = vshrl.u32 %v613, 7
      %v615 = vsub.s32 %v612, %v614
      %v616 = vrot.slane %v581, %v615
      %v617 = vcombine.high %v616, %v616
      %vm618 = vsmask.f32 1280
      %vm619 = vsmask.f32 3336
      %vm620 = vmor %vm618, %vm619
      %vm621 = vsmask.f32 5392
      %vm622 = vmor %vm620, %vm621
      %vm623 = vsmask.f32 7448
      %vm624 = vmor %vm622, %vm623
      %v626 = vshrl.u32 %v592, 16
      %v628 = vrot.slane %v626, 6
      %v629 = vshll.u32 %v592, 16
      %v631 = vrot.slane %v629, 7
      %v632 = vor.u32 %v628, %v631
      %v633 = vrot.slane %v632, 2
      %v635 = vshll.u32 %v593, 16
      %v637 = vrot.slane %v635, 7
      %v638 = vsel %vm624, %v633, %v637
      %v640 = vshrl.u32 %v600, 16
      %v642 = vrot.slane %v640, 6
      %v643 = vshll.u32 %v600, 16
      %v645 = vrot.slane %v643, 7
      %v646 = vor.u32 %v642, %v645
      %v647 = vrot.slane %v646, 2
      %v649 = vshll.u32 %v601, 16
      %v651 = vrot.slane %v649, 7
      %v652 = vsel %vm624, %v647, %v651
      %v654 = vshrl.u32 %v608, 16
      %v656 = vrot.slane %v654, 6
      %v657 = vshll.u32 %v608, 16
      %v659 = vrot.slane %v657, 7
      %v660 = vor.u32 %v656, %v659
      %v661 = vrot.slane %v660, 2
      %v663 = vshll.u32 %v609, 16
      %v665 = vrot.slane %v663, 7
      %v666 = vsel %vm624, %v661, %v665
      %v668 = vshrl.u32 %v616, 16
      %v670 = vrot.slane %v668, 6
      %v671 = vshll.u32 %v616, 16
      %v673 = vrot.slane %v671, 7
      %v674 = vor.u32 %v670, %v673
      %v675 = vrot.slane %v674, 2
      %v677 = vshll.u32 %v617, 16
      %v679 = vrot.slane %v677, 7
      %v680 = vsel %vm624, %v675, %v679
      %s681 = scalar_lea.vmem %s2, 128
      %v682 = vld [vmem:[%s681] sm:$0xf]
      %v683 = vld [vmem:[%s681 + $0x4] sm:$0xf]
      %v684 = vld [vmem:[%s681 + $0x8] sm:$0xf]
      %v685 = vld [vmem:[%s681 + $0xc] sm:$0xf]
      %v686 = vld [vmem:[%s681 + $0x10] sm:$0xf]
      %v687 = vld [vmem:[%s681 + $0x14] sm:$0xf]
      %v688 = vld [vmem:[%s681 + $0x18] sm:$0xf]
      %v689 = vld [vmem:[%s681 + $0x1c] sm:$0xf]
      %v690 = vld [vmem:[%s681 + $0x20] sm:$0xf]
      %v691 = vld [vmem:[%s681 + $0x24] sm:$0xf]
      %v692 = vld [vmem:[%s681 + $0x28] sm:$0xf]
      %v693 = vld [vmem:[%s681 + $0x2c] sm:$0xf]
      %v694 = vld [vmem:[%s681 + $0x30] sm:$0xf]
      %v695 = vld [vmem:[%s681 + $0x34] sm:$0xf]
      %v696 = vld [vmem:[%s681 + $0x38] sm:$0xf]
      %v697 = vld [vmem:[%s681 + $0x3c] sm:$0xf]
      %v698 = vcombine.low %v638, %v652
      %v699 = vcombine.low %v666, %v680
      %v701 = vunpack.c.l.s4 1983009808
      %v702 = vunpack.c.0.s8 %v701
      %v703 = vlaneseq
      %v704 = vshrl.u32 %v703, 7
      %v705 = vsub.s32 %v702, %v704
      %v706 = vrot.slane %v698, %v705
      %v708 = vunpack.c.l.s4 1983009808
      %v709 = vunpack.c.0.s8 %v708
      %v710 = vlaneseq
      %v711 = vshrl.u32 %v710, 7
      %v712 = vsub.s32 %v709, %v711
      %v713 = vrot.slane %v699, %v712
      %v714 = vcombine.low %v706, %v713
      %v732 = vunpack.c.l.b16 %v682
      %v733 = vunpack.c.l.b16 %v683
      %v734 = vunpack.c.l.b16 %v684
      %v735 = vunpack.c.l.b16 %v685
      %v736 = vunpack.c.l.b16 %v686
      %v737 = vunpack.c.l.b16 %v687
      %v738 = vunpack.c.l.b16 %v688
      %v739 = vunpack.c.l.b16 %v689
      %v740 = vunpack.c.l.b16 %v690
      %v741 = vunpack.c.l.b16 %v691
      %v742 = vunpack.c.l.b16 %v692
      %v743 = vunpack.c.l.b16 %v693
      %v744 = vunpack.c.l.b16 %v694
      %v745 = vunpack.c.l.b16 %v695
      %v746 = vunpack.c.l.b16 %v696
      %v747 = vunpack.c.l.b16 %v697
      %v748 = vpack.c.b16 %v733, %v732
      %v749 = vpack.c.b16 %v735, %v734
      %v750 = vpack.c.b16 %v737, %v736
      %v751 = vpack.c.b16 %v739, %v738
      %v752 = vpack.c.b16 %v741, %v740
      %v753 = vpack.c.b16 %v743, %v742
      %v754 = vpack.c.b16 %v745, %v744
      %v755 = vpack.c.b16 %v747, %v746
      %764 = vmatprep.subr.bf16.mxu0 0
      %765 = vmatpush1.bf16.msra.mxu0 %v748
      %766 = vmatprep.subr.bf16.mxu0 0
      %767 = vmatpush1.bf16.msra.mxu0 %v749
      %768 = vmatprep.subr.bf16.mxu0 0
      %769 = vmatpush1.bf16.msra.mxu0 %v750
      %770 = vmatprep.subr.bf16.mxu0 0
      %771 = vmatpush1.bf16.msra.mxu0 %v751
      %772 = vmatprep.subr.bf16.mxu0 0
      %773 = vmatpush1.bf16.msra.mxu0 %v752
      %774 = vmatprep.subr.bf16.mxu0 0
      %775 = vmatpush1.bf16.msra.mxu0 %v753
      %776 = vmatprep.subr.bf16.mxu0 0
      %777 = vmatpush1.bf16.msra.mxu0 %v754
      %778 = vmatprep.subr.bf16.mxu0 0
      %779 = vmatpush1.bf16.msra.mxu0 %v755
      %780 = vmatprep.subr.bf16.mxu0 0
      %781 = vmatpush1.bf16.msra.mxu0 0
      %782 = vmatprep.subr.bf16.mxu0 0
      %783 = vmatpush1.bf16.msra.mxu0 0
      %784 = vmatprep.subr.bf16.mxu0 0
      %785 = vmatpush1.bf16.msra.mxu0 0
      %786 = vmatprep.subr.bf16.mxu0 0
      %787 = vmatpush1.bf16.msra.mxu0 0
      %788 = vmatprep.subr.bf16.mxu0 0
      %789 = vmatpush1.bf16.msra.mxu0 0
      %790 = vmatprep.subr.bf16.mxu0 0
      %791 = vmatpush1.bf16.msra.mxu0 0
      %792 = vmatprep.subr.bf16.mxu0 0
      %793 = vmatpush1.bf16.msra.mxu0 0
      %794 = vmatprep.subr.bf16.mxu0 0
      %795 = vmatpush1.bf16.msra.mxu0 0
      %796 = vmatprep.mubr.bf16.mxu0 0
      %797 = vmatmul.mubr.bf16.gmra.mrb[0].mxu0 %v714
      %v798 = vpop.f32.mrb[0].mxu0
      %v799 = vadd.f32 0.0, %v798
      %v800 = vpop.f32.mrb[0].mxu0
      %v801 = vpop.f32.mrb[0].mxu0
      %v802 = vadd.f32 0.0, %v801
      %v803 = vpop.f32.mrb[0].mxu0
      %804 = vdwg.mxu0
      %v805 = vadd.f32 %v572, %v799
      %v806 = vadd.f32 %v575, %v802
      %s807 = scalar_lea.vmem %s283, 8
      %v808 = vld [vmem:[%s807] sm:$0x3]
      %v809 = vld [vmem:[%s807 + $0x10] sm:$0x3]
      %v810 = vld [vmem:[%s807 + $0x20] sm:$0x3]
      %v811 = vld [vmem:[%s807 + $0x30] sm:$0x3]
      %s812 = scalar_lea.vmem %s2, 192
      %v813 = vld [vmem:[%s812] sm:$0xf]
      %v814 = vld [vmem:[%s812 + $0x4] sm:$0xf]
      %v815 = vld [vmem:[%s812 + $0x8] sm:$0xf]
      %v816 = vld [vmem:[%s812 + $0xc] sm:$0xf]
      %v817 = vld [vmem:[%s812 + $0x10] sm:$0xf]
      %v818 = vld [vmem:[%s812 + $0x14] sm:$0xf]
      %v819 = vld [vmem:[%s812 + $0x18] sm:$0xf]
      %v820 = vld [vmem:[%s812 + $0x1c] sm:$0xf]
      %v821 = vld [vmem:[%s812 + $0x20] sm:$0xf]
      %v822 = vld [vmem:[%s812 + $0x24] sm:$0xf]
      %v823 = vld [vmem:[%s812 + $0x28] sm:$0xf]
      %v824 = vld [vmem:[%s812 + $0x2c] sm:$0xf]
      %v825 = vld [vmem:[%s812 + $0x30] sm:$0xf]
      %v826 = vld [vmem:[%s812 + $0x34] sm:$0xf]
      %v827 = vld [vmem:[%s812 + $0x38] sm:$0xf]
      %v828 = vld [vmem:[%s812 + $0x3c] sm:$0xf]
      %v833 = vcombine.low %v808, %v809
      %v834 = vcombine.low %v810, %v811
      %v836 = vunpack.c.l.s4 1983009808
      %v837 = vunpack.c.0.s8 %v836
      %v838 = vlaneseq
      %v839 = vshrl.u32 %v838, 7
      %v840 = vsub.s32 %v837, %v839
      %v841 = vrot.slane %v833, %v840
      %v843 = vunpack.c.l.s4 1983009808
      %v844 = vunpack.c.0.s8 %v843
      %v845 = vlaneseq
      %v846 = vshrl.u32 %v845, 7
      %v847 = vsub.s32 %v844, %v846
      %v848 = vrot.slane %v834, %v847
      %v849 = vcombine.low %v841, %v848
      %v867 = vunpack.c.l.b16 %v813
      %v868 = vunpack.c.l.b16 %v814
      %v869 = vunpack.c.l.b16 %v815
      %v870 = vunpack.c.l.b16 %v816
      %v871 = vunpack.c.l.b16 %v817
      %v872 = vunpack.c.l.b16 %v818
      %v873 = vunpack.c.l.b16 %v819
      %v874 = vunpack.c.l.b16 %v820
      %v875 = vunpack.c.l.b16 %v821
      %v876 = vunpack.c.l.b16 %v822
      %v877 = vunpack.c.l.b16 %v823
      %v878 = vunpack.c.l.b16 %v824
      %v879 = vunpack.c.l.b16 %v825
      %v880 = vunpack.c.l.b16 %v826
      %v881 = vunpack.c.l.b16 %v827
      %v882 = vunpack.c.l.b16 %v828
      %v883 = vpack.c.b16 %v868, %v867
      %v884 = vpack.c.b16 %v870, %v869
      %v885 = vpack.c.b16 %v872, %v871
      %v886 = vpack.c.b16 %v874, %v873
      %v887 = vpack.c.b16 %v876, %v875
      %v888 = vpack.c.b16 %v878, %v877
      %v889 = vpack.c.b16 %v880, %v879
      %v890 = vpack.c.b16 %v882, %v881
      %899 = vmatprep.subr.bf16.mxu0 0
      %900 = vmatpush1.bf16.msra.mxu0 %v883
      %901 = vmatprep.subr.bf16.mxu0 0
      %902 = vmatpush1.bf16.msra.mxu0 %v884
      %903 = vmatprep.subr.bf16.mxu0 0
      %904 = vmatpush1.bf16.msra.mxu0 %v885
      %905 = vmatprep.subr.bf16.mxu0 0
      %906 = vmatpush1.bf16.msra.mxu0 %v886
      %907 = vmatprep.subr.bf16.mxu0 0
      %908 = vmatpush1.bf16.msra.mxu0 %v887
      %909 = vmatprep.subr.bf16.mxu0 0
      %910 = vmatpush1.bf16.msra.mxu0 %v888
      %911 = vmatprep.subr.bf16.mxu0 0
      %912 = vmatpush1.bf16.msra.mxu0 %v889
      %913 = vmatprep.subr.bf16.mxu0 0
      %914 = vmatpush1.bf16.msra.mxu0 %v890
      %915 = vmatprep.subr.bf16.mxu0 0
      %916 = vmatpush1.bf16.msra.mxu0 0
      %917 = vmatprep.subr.bf16.mxu0 0
      %918 = vmatpush1.bf16.msra.mxu0 0
      %919 = vmatprep.subr.bf16.mxu0 0
      %920 = vmatpush1.bf16.msra.mxu0 0
      %921 = vmatprep.subr.bf16.mxu0 0
      %922 = vmatpush1.bf16.msra.mxu0 0
      %923 = vmatprep.subr.bf16.mxu0 0
      %924 = vmatpush1.bf16.msra.mxu0 0
      %925 = vmatprep.subr.bf16.mxu0 0
      %926 = vmatpush1.bf16.msra.mxu0 0
      %927 = vmatprep.subr.bf16.mxu0 0
      %928 = vmatpush1.bf16.msra.mxu0 0
      %929 = vmatprep.subr.bf16.mxu0 0
      %930 = vmatpush1.bf16.msra.mxu0 0
      %931 = vmatprep.mubr.bf16.mxu0 0
      %932 = vmatmul.mubr.bf16.gmra.mrb[0].mxu0 %v849
      %v933 = vpop.f32.mrb[0].mxu0
      %v934 = vadd.f32 0.0, %v933
      %v935 = vpop.f32.mrb[0].mxu0
      %v936 = vpop.f32.mrb[0].mxu0
      %v937 = vadd.f32 0.0, %v936
      %v938 = vpop.f32.mrb[0].mxu0
      %939 = vdwg.mxu0
      %v940 = vadd.f32 %v805, %v934
      %v941 = vadd.f32 %v806, %v937
      %s942 = scalar_lea.vmem %s283, 12
      %v943 = vld [vmem:[%s942] sm:$0x3]
      %v944 = vld [vmem:[%s942 + $0x10] sm:$0x3]
      %v945 = vld [vmem:[%s942 + $0x20] sm:$0x3]
      %v946 = vld [vmem:[%s942 + $0x30] sm:$0x3]
      %s947 = scalar_lea.vmem %s2, 256
      %v948 = vld [vmem:[%s947] sm:$0xf]
      %v949 = vld [vmem:[%s947 + $0x4] sm:$0xf]
      %v950 = vld [vmem:[%s947 + $0x8] sm:$0xf]
      %v951 = vld [vmem:[%s947 + $0xc] sm:$0xf]
      %v952 = vld [vmem:[%s947 + $0x10] sm:$0xf]
      %v953 = vld [vmem:[%s947 + $0x14] sm:$0xf]
      %v954 = vld [vmem:[%s947 + $0x18] sm:$0xf]
      %v955 = vld [vmem:[%s947 + $0x1c] sm:$0xf]
      %v956 = vld [vmem:[%s947 + $0x20] sm:$0xf]
      %v957 = vld [vmem:[%s947 + $0x24] sm:$0xf]
      %v958 = vld [vmem:[%s947 + $0x28] sm:$0xf]
      %v959 = vld [vmem:[%s947 + $0x2c] sm:$0xf]
      %v960 = vld [vmem:[%s947 + $0x30] sm:$0xf]
      %v961 = vld [vmem:[%s947 + $0x34] sm:$0xf]
      %v962 = vld [vmem:[%s947 + $0x38] sm:$0xf]
      %v963 = vld [vmem:[%s947 + $0x3c] sm:$0xf]
      %v968 = vcombine.low %v943, %v944
      %v969 = vcombine.low %v945, %v946
      %v971 = vunpack.c.l.s4 1983009808
      %v972 = vunpack.c.0.s8 %v971
      %v973 = vlaneseq
      %v974 = vshrl.u32 %v973, 7
      %v975 = vsub.s32 %v972, %v974
      %v976 = vrot.slane %v968, %v975
      %v978 = vunpack.c.l.s4 1983009808
      %v979 = vunpack.c.0.s8 %v978
      %v980 = vlaneseq
      %v981 = vshrl.u32 %v980, 7
      %v982 = vsub.s32 %v979, %v981
      %v983 = vrot.slane %v969, %v982
      %v984 = vcombine.low %v976, %v983
      %v1002 = vunpack.c.l.b16 %v948
      %v1003 = vunpack.c.l.b16 %v949
      %v1004 = vunpack.c.l.b16 %v950
      %v1005 = vunpack.c.l.b16 %v951
      %v1006 = vunpack.c.l.b16 %v952
      %v1007 = vunpack.c.l.b16 %v953
      %v1008 = vunpack.c.l.b16 %v954
      %v1009 = vunpack.c.l.b16 %v955
      %v1010 = vunpack.c.l.b16 %v956
      %v1011 = vunpack.c.l.b16 %v957
      %v1012 = vunpack.c.l.b16 %v958
      %v1013 = vunpack.c.l.b16 %v959
      %v1014 = vunpack.c.l.b16 %v960
      %v1015 = vunpack.c.l.b16 %v961
      %v1016 = vunpack.c.l.b16 %v962
      %v1017 = vunpack.c.l.b16 %v963
      %v1018 = vpack.c.b16 %v1003, %v1002
      %v1019 = vpack.c.b16 %v1005, %v1004
      %v1020 = vpack.c.b16 %v1007, %v1006
      %v1021 = vpack.c.b16 %v1009, %v1008
      %v1022 = vpack.c.b16 %v1011, %v1010
      %v1023 = vpack.c.b16 %v1013, %v1012
      %v1024 = vpack.c.b16 %v1015, %v1014
      %v1025 = vpack.c.b16 %v1017, %v1016
      %1034 = vmatprep.subr.bf16.mxu0 0
      %1035 = vmatpush1.bf16.msra.mxu0 %v1018
      %1036 = vmatprep.subr.bf16.mxu0 0
      %1037 = vmatpush1.bf16.msra.mxu0 %v1019
      %1038 = vmatprep.subr.bf16.mxu0 0
      %1039 = vmatpush1.bf16.msra.mxu0 %v1020
      %1040 = vmatprep.subr.bf16.mxu0 0
      %1041 = vmatpush1.bf16.msra.mxu0 %v1021
      %1042 = vmatprep.subr.bf16.mxu0 0
      %1043 = vmatpush1.bf16.msra.mxu0 %v1022
      %1044 = vmatprep.subr.bf16.mxu0 0
      %1045 = vmatpush1.bf16.msra.mxu0 %v1023
      %1046 = vmatprep.subr.bf16.mxu0 0
      %1047 = vmatpush1.bf16.msra.mxu0 %v1024
      %1048 = vmatprep.subr.bf16.mxu0 0
      %1049 = vmatpush1.bf16.msra.mxu0 %v1025
      %1050 = vmatprep.subr.bf16.mxu0 0
      %1051 = vmatpush1.bf16.msra.mxu0 0
      %1052 = vmatprep.subr.bf16.mxu0 0
      %1053 = vmatpush1.bf16.msra.mxu0 0
      %1054 = vmatprep.subr.bf16.mxu0 0
      %1055 = vmatpush1.bf16.msra.mxu0 0
      %1056 = vmatprep.subr.bf16.mxu0 0
      %1057 = vmatpush1.bf16.msra.mxu0 0
      %1058 = vmatprep.subr.bf16.mxu0 0
      %1059 = vmatpush1.bf16.msra.mxu0 0
      %1060 = vmatprep.subr.bf16.mxu0 0
      %1061 = vmatpush1.bf16.msra.mxu0 0
      %1062 = vmatprep.subr.bf16.mxu0 0
      %1063 = vmatpush1.bf16.msra.mxu0 0
      %1064 = vmatprep.subr.bf16.mxu0 0
      %1065 = vmatpush1.bf16.msra.mxu0 0
      %1066 = vmatprep.mubr.bf16.mxu0 0
      %1067 = vmatmul.mubr.bf16.gmra.mrb[0].mxu0 %v984
      %v1068 = vpop.f32.mrb[0].mxu0
      %v1069 = vadd.f32 0.0, %v1068
      %v1070 = vpop.f32.mrb[0].mxu0
      %v1071 = vpop.f32.mrb[0].mxu0
      %v1072 = vadd.f32 0.0, %v1071
      %v1073 = vpop.f32.mrb[0].mxu0
      %1074 = vdwg.mxu0
      %v1075 = vadd.f32 %v940, %v1069
      %v1076 = vadd.f32 %v941, %v1072
      %v1077 = vld [vmem:[%s807] sm:$0x7]
      %v1078 = vld [vmem:[%s807 + $0x10] sm:$0x7]
      %v1079 = vld [vmem:[%s807 + $0x20] sm:$0x7]
      %v1080 = vld [vmem:[%s807 + $0x30] sm:$0x7]
      %v1086 = vunpack.c.l.s4 1983009808
      %v1087 = vunpack.c.0.s8 %v1086
      %v1088 = vlaneseq
      %v1089 = vshrl.u32 %v1088, 7
      %v1090 = vsub.s32 %v1087, %v1089
      %v1091 = vrot.slane %v1077, %v1090
      %v1092 = vcombine.high %v1091, %v1091
      %v1094 = vunpack.c.l.s4 1983009808
      %v1095 = vunpack.c.0.s8 %v1094
      %v1096 = vlaneseq
      %v1097 = vshrl.u32 %v1096, 7
      %v1098 = vsub.s32 %v1095, %v1097
      %v1099 = vrot.slane %v1078, %v1098
      %v1100 = vcombine.high %v1099, %v1099
      %v1102 = vunpack.c.l.s4 1983009808
      %v1103 = vunpack.c.0.s8 %v1102
      %v1104 = vlaneseq
      %v1105 = vshrl.u32 %v1104, 7
      %v1106 = vsub.s32 %v1103, %v1105
      %v1107 = vrot.slane %v1079, %v1106
      %v1108 = vcombine.high %v1107, %v1107
      %v1110 = vunpack.c.l.s4 1983009808
      %v1111 = vunpack.c.0.s8 %v1110
      %v1112 = vlaneseq
      %v1113 = vshrl.u32 %v1112, 7
      %v1114 = vsub.s32 %v1111, %v1113
      %v1115 = vrot.slane %v1080, %v1114
      %v1116 = vcombine.high %v1115, %v1115
      %v1118 = vshrl.u32 %v1091, 16
      %v1120 = vrot.slane %v1118, 6
      %v1121 = vshll.u32 %v1091, 16
      %v1123 = vrot.slane %v1121, 7
      %v1124 = vor.u32 %v1120, %v1123
      %v1125 = vrot.slane %v1124, 2
      %v1127 = vshll.u32 %v1092, 16
      %v1129 = vrot.slane %v1127, 7
      %v1130 = vsel %vm624, %v1125, %v1129
      %v1132 = vshrl.u32 %v1099, 16
      %v1134 = vrot.slane %v1132, 6
      %v1135 = vshll.u32 %v1099, 16
      %v1137 = vrot.slane %v1135, 7
      %v1138 = vor.u32 %v1134, %v1137
      %v1139 = vrot.slane %v1138, 2
      %v1141 = vshll.u32 %v1100, 16
      %v1143 = vrot.slane %v1141, 7
      %v1144 = vsel %vm624, %v1139, %v1143
      %v1146 = vshrl.u32 %v1107, 16
      %v1148 = vrot.slane %v1146, 6
      %v1149 = vshll.u32 %v1107, 16
      %v1151 = vrot.slane %v1149, 7
      %v1152 = vor.u32 %v1148, %v1151
      %v1153 = vrot.slane %v1152, 2
      %v1155 = vshll.u32 %v1108, 16
      %v1157 = vrot.slane %v1155, 7
      %v1158 = vsel %vm624, %v1153, %v1157
      %v1160 = vshrl.u32 %v1115, 16
      %v1162 = vrot.slane %v1160, 6
      %v1163 = vshll.u32 %v1115, 16
      %v1165 = vrot.slane %v1163, 7
      %v1166 = vor.u32 %v1162, %v1165
      %v1167 = vrot.slane %v1166, 2
      %v1169 = vshll.u32 %v1116, 16
      %v1171 = vrot.slane %v1169, 7
      %v1172 = vsel %vm624, %v1167, %v1171
      %s1173 = scalar_lea.vmem %s2, 320
      %v1174 = vld [vmem:[%s1173] sm:$0xf]
      %v1175 = vld [vmem:[%s1173 + $0x4] sm:$0xf]
      %v1176 = vld [vmem:[%s1173 + $0x8] sm:$0xf]
      %v1177 = vld [vmem:[%s1173 + $0xc] sm:$0xf]
      %v1178 = vld [vmem:[%s1173 + $0x10] sm:$0xf]
      %v1179 = vld [vmem:[%s1173 + $0x14] sm:$0xf]
      %v1180 = vld [vmem:[%s1173 + $0x18] sm:$0xf]
      %v1181 = vld [vmem:[%s1173 + $0x1c] sm:$0xf]
      %v1182 = vld [vmem:[%s1173 + $0x20] sm:$0xf]
      %v1183 = vld [vmem:[%s1173 + $0x24] sm:$0xf]
      %v1184 = vld [vmem:[%s1173 + $0x28] sm:$0xf]
      %v1185 = vld [vmem:[%s1173 + $0x2c] sm:$0xf]
      %v1186 = vld [vmem:[%s1173 + $0x30] sm:$0xf]
      %v1187 = vld [vmem:[%s1173 + $0x34] sm:$0xf]
      %v1188 = vld [vmem:[%s1173 + $0x38] sm:$0xf]
      %v1189 = vld [vmem:[%s1173 + $0x3c] sm:$0xf]
      %v1190 = vcombine.low %v1130, %v1144
      %v1191 = vcombine.low %v1158, %v1172
      %v1193 = vunpack.c.l.s4 1983009808
      %v1194 = vunpack.c.0.s8 %v1193
      %v1195 = vlaneseq
      %v1196 = vshrl.u32 %v1195, 7
      %v1197 = vsub.s32 %v1194, %v1196
      %v1198 = vrot.slane %v1190, %v1197
      %v1200 = vunpack.c.l.s4 1983009808
      %v1201 = vunpack.c.0.s8 %v1200
      %v1202 = vlaneseq
      %v1203 = vshrl.u32 %v1202, 7
      %v1204 = vsub.s32 %v1201, %v1203
      %v1205 = vrot.slane %v1191, %v1204
      %v1206 = vcombine.low %v1198, %v1205
      %v1224 = vunpack.c.l.b16 %v1174
      %v1225 = vunpack.c.l.b16 %v1175
      %v1226 = vunpack.c.l.b16 %v1176
      %v1227 = vunpack.c.l.b16 %v1177
      %v1228 = vunpack.c.l.b16 %v1178
      %v1229 = vunpack.c.l.b16 %v1179
      %v1230 = vunpack.c.l.b16 %v1180
      %v1231 = vunpack.c.l.b16 %v1181
      %v1232 = vunpack.c.l.b16 %v1182
      %v1233 = vunpack.c.l.b16 %v1183
      %v1234 = vunpack.c.l.b16 %v1184
      %v1235 = vunpack.c.l.b16 %v1185
      %v1236 = vunpack.c.l.b16 %v1186
      %v1237 = vunpack.c.l.b16 %v1187
      %v1238 = vunpack.c.l.b16 %v1188
      %v1239 = vunpack.c.l.b16 %v1189
      %v1240 = vpack.c.b16 %v1225, %v1224
      %v1241 = vpack.c.b16 %v1227, %v1226
      %v1242 = vpack.c.b16 %v1229, %v1228
      %v1243 = vpack.c.b16 %v1231, %v1230
      %v1244 = vpack.c.b16 %v1233, %v1232
      %v1245 = vpack.c.b16 %v1235, %v1234
      %v1246 = vpack.c.b16 %v1237, %v1236
      %v1247 = vpack.c.b16 %v1239, %v1238
      %1256 = vmatprep.subr.bf16.mxu0 0
      %1257 = vmatpush1.bf16.msra.mxu0 %v1240
      %1258 = vmatprep.subr.bf16.mxu0 0
      %1259 = vmatpush1.bf16.msra.mxu0 %v1241
      %1260 = vmatprep.subr.bf16.mxu0 0
      %1261 = vmatpush1.bf16.msra.mxu0 %v1242
      %1262 = vmatprep.subr.bf16.mxu0 0
      %1263 = vmatpush1.bf16.msra.mxu0 %v1243
      %1264 = vmatprep.subr.bf16.mxu0 0
      %1265 = vmatpush1.bf16.msra.mxu0 %v1244
      %1266 = vmatprep.subr.bf16.mxu0 0
      %1267 = vmatpush1.bf16.msra.mxu0 %v1245
      %1268 = vmatprep.subr.bf16.mxu0 0
      %1269 = vmatpush1.bf16.msra.mxu0 %v1246
      %1270 = vmatprep.subr.bf16.mxu0 0
      %1271 = vmatpush1.bf16.msra.mxu0 %v1247
      %1272 = vmatprep.subr.bf16.mxu0 0
      %1273 = vmatpush1.bf16.msra.mxu0 0
      %1274 = vmatprep.subr.bf16.mxu0 0
      %1275 = vmatpush1.bf16.msra.mxu0 0
      %1276 = vmatprep.subr.bf16.mxu0 0
      %1277 = vmatpush1.bf16.msra.mxu0 0
      %1278 = vmatprep.subr.bf16.mxu0 0
      %1279 = vmatpush1.bf16.msra.mxu0 0
      %1280 = vmatprep.subr.bf16.mxu0 0
      %1281 = vmatpush1.bf16.msra.mxu0 0
      %1282 = vmatprep.subr.bf16.mxu0 0
      %1283 = vmatpush1.bf16.msra.mxu0 0
      %1284 = vmatprep.subr.bf16.mxu0 0
      %1285 = vmatpush1.bf16.msra.mxu0 0
      %1286 = vmatprep.subr.bf16.mxu0 0
      %1287 = vmatpush1.bf16.msra.mxu0 0
      %1288 = vmatprep.mubr.bf16.mxu0 0
      %1289 = vmatmul.mubr.bf16.gmra.mrb[0].mxu0 %v1206
      %v1290 = vpop.f32.mrb[0].mxu0
      %v1291 = vadd.f32 0.0, %v1290
      %v1292 = vpop.f32.mrb[0].mxu0
      %v1293 = vpop.f32.mrb[0].mxu0
      %v1294 = vadd.f32 0.0, %v1293
      %v1295 = vpop.f32.mrb[0].mxu0
      %1296 = vdwg.mxu0
      %v1297 = vadd.f32 %v1075, %v1291
      %v1298 = vadd.f32 %v1076, %v1294
      %s1299 = scalar_lea.vmem %s283, 16
      %v1300 = vld [vmem:[%s1299] sm:$0x3]
      %v1301 = vld [vmem:[%s1299 + $0x10] sm:$0x3]
      %v1302 = vld [vmem:[%s1299 + $0x20] sm:$0x3]
      %v1303 = vld [vmem:[%s300] sm:$0x3]
      %s1304 = scalar_lea.vmem %s2, 384
      %v1305 = vld [vmem:[%s1304] sm:$0xf]
      %v1306 = vld [vmem:[%s1304 + $0x4] sm:$0xf]
      %v1307 = vld [vmem:[%s1304 + $0x8] sm:$0xf]
      %v1308 = vld [vmem:[%s1304 + $0xc] sm:$0xf]
      %v1309 = vld [vmem:[%s1304 + $0x10] sm:$0xf]
      %v1310 = vld [vmem:[%s1304 + $0x14] sm:$0xf]
      %v1311 = vld [vmem:[%s1304 + $0x18] sm:$0xf]
      %v1312 = vld [vmem:[%s1304 + $0x1c] sm:$0xf]
      %v1313 = vld [vmem:[%s1304 + $0x20] sm:$0xf]
      %v1314 = vld [vmem:[%s1304 + $0x24] sm:$0xf]
      %v1315 = vld [vmem:[%s1304 + $0x28] sm:$0xf]
      %v1316 = vld [vmem:[%s1304 + $0x2c] sm:$0xf]
      %v1317 = vld [vmem:[%s1304 + $0x30] sm:$0xf]
      %v1318 = vld [vmem:[%s1304 + $0x34] sm:$0xf]
      %v1319 = vld [vmem:[%s1304 + $0x38] sm:$0xf]
      %v1320 = vld [vmem:[%s1304 + $0x3c] sm:$0xf]
      %v1325 = vcombine.low %v1300, %v1301
      %v1326 = vcombine.low %v1302, %v1303
      %v1328 = vunpack.c.l.s4 1983009808
      %v1329 = vunpack.c.0.s8 %v1328
      %v1330 = vlaneseq
      %v1331 = vshrl.u32 %v1330, 7
      %v1332 = vsub.s32 %v1329, %v1331
      %v1333 = vrot.slane %v1325, %v1332
      %v1335 = vunpack.c.l.s4 1983009808
      %v1336 = vunpack.c.0.s8 %v1335
      %v1337 = vlaneseq
      %v1338 = vshrl.u32 %v1337, 7
      %v1339 = vsub.s32 %v1336, %v1338
      %v1340 = vrot.slane %v1326, %v1339
      %v1341 = vcombine.low %v1333, %v1340
      %v1359 = vunpack.c.l.b16 %v1305
      %v1360 = vunpack.c.l.b16 %v1306
      %v1361 = vunpack.c.l.b16 %v1307
      %v1362 = vunpack.c.l.b16 %v1308
      %v1363 = vunpack.c.l.b16 %v1309
      %v1364 = vunpack.c.l.b16 %v1310
      %v1365 = vunpack.c.l.b16 %v1311
      %v1366 = vunpack.c.l.b16 %v1312
      %v1367 = vunpack.c.l.b16 %v1313
      %v1368 = vunpack.c.l.b16 %v1314
      %v1369 = vunpack.c.l.b16 %v1315
      %v1370 = vunpack.c.l.b16 %v1316
      %v1371 = vunpack.c.l.b16 %v1317
      %v1372 = vunpack.c.l.b16 %v1318
      %v1373 = vunpack.c.l.b16 %v1319
      %v1374 = vunpack.c.l.b16 %v1320
      %v1375 = vpack.c.b16 %v1360, %v1359
      %v1376 = vpack.c.b16 %v1362, %v1361
      %v1377 = vpack.c.b16 %v1364, %v1363
      %v1378 = vpack.c.b16 %v1366, %v1365
      %v1379 = vpack.c.b16 %v1368, %v1367
      %v1380 = vpack.c.b16 %v1370, %v1369
      %v1381 = vpack.c.b16 %v1372, %v1371
      %v1382 = vpack.c.b16 %v1374, %v1373
      %1391 = vmatprep.subr.bf16.mxu0 0
      %1392 = vmatpush1.bf16.msra.mxu0 %v1375
      %1393 = vmatprep.subr.bf16.mxu0 0
      %1394 = vmatpush1.bf16.msra.mxu0 %v1376
      %1395 = vmatprep.subr.bf16.mxu0 0
      %1396 = vmatpush1.bf16.msra.mxu0 %v1377
      %1397 = vmatprep.subr.bf16.mxu0 0
      %1398 = vmatpush1.bf16.msra.mxu0 %v1378
      %1399 = vmatprep.subr.bf16.mxu0 0
      %1400 = vmatpush1.bf16.msra.mxu0 %v1379
      %1401 = vmatprep.subr.bf16.mxu0 0
      %1402 = vmatpush1.bf16.msra.mxu0 %v1380
      %1403 = vmatprep.subr.bf16.mxu0 0
      %1404 = vmatpush1.bf16.msra.mxu0 %v1381
      %1405 = vmatprep.subr.bf16.mxu0 0
      %1406 = vmatpush1.bf16.msra.mxu0 %v1382
      %1407 = vmatprep.subr.bf16.mxu0 0
      %1408 = vmatpush1.bf16.msra.mxu0 0
      %1409 = vmatprep.subr.bf16.mxu0 0
      %1410 = vmatpush1.bf16.msra.mxu0 0
      %1411 = vmatprep.subr.bf16.mxu0 0
      %1412 = vmatpush1.bf16.msra.mxu0 0
      %1413 = vmatprep.subr.bf16.mxu0 0
      %1414 = vmatpush1.bf16.msra.mxu0 0
      %1415 = vmatprep.subr.bf16.mxu0 0
      %1416 = vmatpush1.bf16.msra.mxu0 0
      %1417 = vmatprep.subr.bf16.mxu0 0
      %1418 = vmatpush1.bf16.msra.mxu0 0
      %1419 = vmatprep.subr.bf16.mxu0 0
      %1420 = vmatpush1.bf16.msra.mxu0 0
      %1421 = vmatprep.subr.bf16.mxu0 0
      %1422 = vmatpush1.bf16.msra.mxu0 0
      %1423 = vmatprep.mubr.bf16.mxu0 0
      %1424 = vmatmul.mubr.bf16.gmra.mrb[0].mxu0 %v1341
      %v1425 = vpop.f32.mrb[0].mxu0
      %v1426 = vadd.f32 0.0, %v1425
      %v1427 = vpop.f32.mrb[0].mxu0
      %v1428 = vpop.f32.mrb[0].mxu0
      %v1429 = vadd.f32 0.0, %v1428
      %v1430 = vpop.f32.mrb[0].mxu0
      %1431 = vdwg.mxu0
      %v1432 = vadd.f32 %v1297, %v1426
      %v1433 = vadd.f32 %v1298, %v1429
      %s1434 = scalar_lea.vmem %s283, 20
      %v1435 = vld [vmem:[%s1434] sm:$0x3]
      %v1436 = vld [vmem:[%s1434 + $0x10] sm:$0x3]
      %v1437 = vld [vmem:[%s1434 + $0x20] sm:$0x3]
      %s1438 = scalar_lea.vmem %s300, 4
      %v1439 = vld [vmem:[%s1438] sm:$0x3]
      %s1440 = scalar_lea.vmem %s2, 448
      %v1441 = vld [vmem:[%s1440] sm:$0xf]
      %v1442 = vld [vmem:[%s1440 + $0x4] sm:$0xf]
      %v1443 = vld [vmem:[%s1440 + $0x8] sm:$0xf]
      %v1444 = vld [vmem:[%s1440 + $0xc] sm:$0xf]
      %v1445 = vld [vmem:[%s1440 + $0x10] sm:$0xf]
      %v1446 = vld [vmem:[%s1440 + $0x14] sm:$0xf]
      %v1447 = vld [vmem:[%s1440 + $0x18] sm:$0xf]
      %v1448 = vld [vmem:[%s1440 + $0x1c] sm:$0xf]
      %v1449 = vld [vmem:[%s1440 + $0x20] sm:$0xf]
      %v1450 = vld [vmem:[%s1440 + $0x24] sm:$0xf]
      %v1451 = vld [vmem:[%s1440 + $0x28] sm:$0xf]
      %v1452 = vld [vmem:[%s1440 + $0x2c] sm:$0xf]
      %v1453 = vld [vmem:[%s1440 + $0x30] sm:$0xf]
      %v1454 = vld [vmem:[%s1440 + $0x34] sm:$0xf]
      %v1455 = vld [vmem:[%s1440 + $0x38] sm:$0xf]
      %v1456 = vld [vmem:[%s1440 + $0x3c] sm:$0xf]
      %v1461 = vcombine.low %v1435, %v1436
      %v1462 = vcombine.low %v1437, %v1439
      %v1464 = vunpack.c.l.s4 1983009808
      %v1465 = vunpack.c.0.s8 %v1464
      %v1466 = vlaneseq
      %v1467 = vshrl.u32 %v1466, 7
      %v1468 = vsub.s32 %v1465, %v1467
      %v1469 = vrot.slane %v1461, %v1468
      %v1471 = vunpack.c.l.s4 1983009808
      %v1472 = vunpack.c.0.s8 %v1471
      %v1473 = vlaneseq
      %v1474 = vshrl.u32 %v1473, 7
      %v1475 = vsub.s32 %v1472, %v1474
      %v1476 = vrot.slane %v1462, %v1475
      %v1477 = vcombine.low %v1469, %v1476
      %v1495 = vunpack.c.l.b16 %v1441
      %v1496 = vunpack.c.l.b16 %v1442
      %v1497 = vunpack.c.l.b16 %v1443
      %v1498 = vunpack.c.l.b16 %v1444
      %v1499 = vunpack.c.l.b16 %v1445
      %v1500 = vunpack.c.l.b16 %v1446
      %v1501 = vunpack.c.l.b16 %v1447
      %v1502 = vunpack.c.l.b16 %v1448
      %v1503 = vunpack.c.l.b16 %v1449
      %v1504 = vunpack.c.l.b16 %v1450
      %v1505 = vunpack.c.l.b16 %v1451
      %v1506 = vunpack.c.l.b16 %v1452
      %v1507 = vunpack.c.l.b16 %v1453
      %v1508 = vunpack.c.l.b16 %v1454
      %v1509 = vunpack.c.l.b16 %v1455
      %v1510 = vunpack.c.l.b16 %v1456
      %v1511 = vpack.c.b16 %v1496, %v1495
      %v1512 = vpack.c.b16 %v1498, %v1497
      %v1513 = vpack.c.b16 %v1500, %v1499
      %v1514 = vpack.c.b16 %v1502, %v1501
      %v1515 = vpack.c.b16 %v1504, %v1503
      %v1516 = vpack.c.b16 %v1506, %v1505
      %v1517 = vpack.c.b16 %v1508, %v1507
      %v1518 = vpack.c.b16 %v1510, %v1509
      %1527 = vmatprep.subr.bf16.mxu0 0
      %1528 = vmatpush1.bf16.msra.mxu0 %v1511
      %1529 = vmatprep.subr.bf16.mxu0 0
      %1530 = vmatpush1.bf16.msra.mxu0 %v1512
      %1531 = vmatprep.subr.bf16.mxu0 0
      %1532 = vmatpush1.bf16.msra.mxu0 %v1513
      %1533 = vmatprep.subr.bf16.mxu0 0
      %1534 = vmatpush1.bf16.msra.mxu0 %v1514
      %1535 = vmatprep.subr.bf16.mxu0 0
      %1536 = vmatpush1.bf16.msra.mxu0 %v1515
      %1537 = vmatprep.subr.bf16.mxu0 0
      %1538 = vmatpush1.bf16.msra.mxu0 %v1516
      %1539 = vmatprep.subr.bf16.mxu0 0
      %1540 = vmatpush1.bf16.msra.mxu0 %v1517
      %1541 = vmatprep.subr.bf16.mxu0 0
      %1542 = vmatpush1.bf16.msra.mxu0 %v1518
      %1543 = vmatprep.subr.bf16.mxu0 0
      %1544 = vmatpush1.bf16.msra.mxu0 0
      %1545 = vmatprep.subr.bf16.mxu0 0
      %1546 = vmatpush1.bf16.msra.mxu0 0
      %1547 = vmatprep.subr.bf16.mxu0 0
      %1548 = vmatpush1.bf16.msra.mxu0 0
      %1549 = vmatprep.subr.bf16.mxu0 0
      %1550 = vmatpush1.bf16.msra.mxu0 0
      %1551 = vmatprep.subr.bf16.mxu0 0
      %1552 = vmatpush1.bf16.msra.mxu0 0
      %1553 = vmatprep.subr.bf16.mxu0 0
      %1554 = vmatpush1.bf16.msra.mxu0 0
      %1555 = vmatprep.subr.bf16.mxu0 0
      %1556 = vmatpush1.bf16.msra.mxu0 0
      %1557 = vmatprep.subr.bf16.mxu0 0
      %1558 = vmatpush1.bf16.msra.mxu0 0
      %1559 = vmatprep.mubr.bf16.mxu0 0
      %1560 = vmatmul.mubr.bf16.gmra.mrb[0].mxu0 %v1477
      %v1561 = vpop.f32.mrb[0].mxu0
      %v1562 = vadd.f32 0.0, %v1561
      %v1563 = vpop.f32.mrb[0].mxu0
      %v1564 = vpop.f32.mrb[0].mxu0
      %v1565 = vadd.f32 0.0, %v1564
      %v1566 = vpop.f32.mrb[0].mxu0
      %1567 = vdwg.mxu0
      %v1568 = vadd.f32 %v1432, %v1562
      %v1569 = vadd.f32 %v1433, %v1565
      %v1570 = vld [vmem:[%s1299] sm:$0x7]
      %v1571 = vld [vmem:[%s1299 + $0x10] sm:$0x7]
      %v1572 = vld [vmem:[%s1299 + $0x20] sm:$0x7]
      %v1573 = vld [vmem:[%s300] sm:$0x7]
      %v1579 = vunpack.c.l.s4 1983009808
      %v1580 = vunpack.c.0.s8 %v1579
      %v1581 = vlaneseq
      %v1582 = vshrl.u32 %v1581, 7
      %v1583 = vsub.s32 %v1580, %v1582
      %v1584 = vrot.slane %v1570, %v1583
      %v1585 = vcombine.high %v1584, %v1584
      %v1587 = vunpack.c.l.s4 1983009808
      %v1588 = vunpack.c.0.s8 %v1587
      %v1589 = vlaneseq
      %v1590 = vshrl.u32 %v1589, 7
      %v1591 = vsub.s32 %v1588, %v1590
      %v1592 = vrot.slane %v1571, %v1591
      %v1593 = vcombine.high %v1592, %v1592
      %v1595 = vunpack.c.l.s4 1983009808
      %v1596 = vunpack.c.0.s8 %v1595
      %v1597 = vlaneseq
      %v1598 = vshrl.u32 %v1597, 7
      %v1599 = vsub.s32 %v1596, %v1598
      %v1600 = vrot.slane %v1572, %v1599
      %v1601 = vcombine.high %v1600, %v1600
      %v1603 = vunpack.c.l.s4 1983009808
      %v1604 = vunpack.c.0.s8 %v1603
      %v1605 = vlaneseq
      %v1606 = vshrl.u32 %v1605, 7
      %v1607 = vsub.s32 %v1604, %v1606
      %v1608 = vrot.slane %v1573, %v1607
      %v1609 = vcombine.high %v1608, %v1608
      %v1611 = vshrl.u32 %v1584, 16
      %v1613 = vrot.slane %v1611, 6
      %v1614 = vshll.u32 %v1584, 16
      %v1616 = vrot.slane %v1614, 7
      %v1617 = vor.u32 %v1613, %v1616
      %v1618 = vrot.slane %v1617, 2
      %v1620 = vshll.u32 %v1585, 16
      %v1622 = vrot.slane %v1620, 7
      %v1623 = vsel %vm624, %v1618, %v1622
      %v1625 = vshrl.u32 %v1592, 16
      %v1627 = vrot.slane %v1625, 6
      %v1628 = vshll.u32 %v1592, 16
      %v1630 = vrot.slane %v1628, 7
      %v1631 = vor.u32 %v1627, %v1630
      %v1632 = vrot.slane %v1631, 2
      %v1634 = vshll.u32 %v1593, 16
      %v1636 = vrot.slane %v1634, 7
      %v1637 = vsel %vm624, %v1632, %v1636
      %v1639 = vshrl.u32 %v1600, 16
      %v1641 = vrot.slane %v1639, 6
      %v1642 = vshll.u32 %v1600, 16
      %v1644 = vrot.slane %v1642, 7
      %v1645 = vor.u32 %v1641, %v1644
      %v1646 = vrot.slane %v1645, 2
      %v1648 = vshll.u32 %v1601, 16
      %v1650 = vrot.slane %v1648, 7
      %v1651 = vsel %vm624, %v1646, %v1650
      %v1653 = vshrl.u32 %v1608, 16
      %v1655 = vrot.slane %v1653, 6
      %v1656 = vshll.u32 %v1608, 16
      %v1658 = vrot.slane %v1656, 7
      %v1659 = vor.u32 %v1655, %v1658
      %v1660 = vrot.slane %v1659, 2
      %v1662 = vshll.u32 %v1609, 16
      %v1664 = vrot.slane %v1662, 7
      %v1665 = vsel %vm624, %v1660, %v1664
      %s1666 = scalar_lea.vmem %s2, 512
      %v1667 = vld [vmem:[%s1666] sm:$0xf]
      %v1668 = vld [vmem:[%s1666 + $0x4] sm:$0xf]
      %v1669 = vld [vmem:[%s1666 + $0x8] sm:$0xf]
      %v1670 = vld [vmem:[%s1666 + $0xc] sm:$0xf]
      %v1671 = vld [vmem:[%s1666 + $0x10] sm:$0xf]
      %v1672 = vld [vmem:[%s1666 + $0x14] sm:$0xf]
      %v1673 = vld [vmem:[%s1666 + $0x18] sm:$0xf]
      %v1674 = vld [vmem:[%s1666 + $0x1c] sm:$0xf]
      %v1675 = vld [vmem:[%s1666 + $0x20] sm:$0xf]
      %v1676 = vld [vmem:[%s1666 + $0x24] sm:$0xf]
      %v1677 = vld [vmem:[%s1666 + $0x28] sm:$0xf]
      %v1678 = vld [vmem:[%s1666 + $0x2c] sm:$0xf]
      %v1679 = vld [vmem:[%s1666 + $0x30] sm:$0xf]
      %v1680 = vld [vmem:[%s1666 + $0x34] sm:$0xf]
      %v1681 = vld [vmem:[%s1666 + $0x38] sm:$0xf]
      %v1682 = vld [vmem:[%s1666 + $0x3c] sm:$0xf]
      %v1683 = vcombine.low %v1623, %v1637
      %v1684 = vcombine.low %v1651, %v1665
      %v1686 = vunpack.c.l.s4 1983009808
      %v1687 = vunpack.c.0.s8 %v1686
      %v1688 = vlaneseq
      %v1689 = vshrl.u32 %v1688, 7
      %v1690 = vsub.s32 %v1687, %v1689
      %v1691 = vrot.slane %v1683, %v1690
      %v1693 = vunpack.c.l.s4 1983009808
      %v1694 = vunpack.c.0.s8 %v1693
      %v1695 = vlaneseq
      %v1696 = vshrl.u32 %v1695, 7
      %v1697 = vsub.s32 %v1694, %v1696
      %v1698 = vrot.slane %v1684, %v1697
      %v1699 = vcombine.low %v1691, %v1698
      %v1717 = vunpack.c.l.b16 %v1667
      %v1718 = vunpack.c.l.b16 %v1668
      %v1719 = vunpack.c.l.b16 %v1669
      %v1720 = vunpack.c.l.b16 %v1670
      %v1721 = vunpack.c.l.b16 %v1671
      %v1722 = vunpack.c.l.b16 %v1672
      %v1723 = vunpack.c.l.b16 %v1673
      %v1724 = vunpack.c.l.b16 %v1674
      %v1725 = vunpack.c.l.b16 %v1675
      %v1726 = vunpack.c.l.b16 %v1676
      %v1727 = vunpack.c.l.b16 %v1677
      %v1728 = vunpack.c.l.b16 %v1678
      %v1729 = vunpack.c.l.b16 %v1679
      %v1730 = vunpack.c.l.b16 %v1680
      %v1731 = vunpack.c.l.b16 %v1681
      %v1732 = vunpack.c.l.b16 %v1682
      %v1733 = vpack.c.b16 %v1718, %v1717
      %v1734 = vpack.c.b16 %v1720, %v1719
      %v1735 = vpack.c.b16 %v1722, %v1721
      %v1736 = vpack.c.b16 %v1724, %v1723
      %v1737 = vpack.c.b16 %v1726, %v1725
      %v1738 = vpack.c.b16 %v1728, %v1727
      %v1739 = vpack.c.b16 %v1730, %v1729
      %v1740 = vpack.c.b16 %v1732, %v1731
      %1749 = vmatprep.subr.bf16.mxu0 0
      %1750 = vmatpush1.bf16.msra.mxu0 %v1733
      %1751 = vmatprep.subr.bf16.mxu0 0
      %1752 = vmatpush1.bf16.msra.mxu0 %v1734
      %1753 = vmatprep.subr.bf16.mxu0 0
      %1754 = vmatpush1.bf16.msra.mxu0 %v1735
      %1755 = vmatprep.subr.bf16.mxu0 0
      %1756 = vmatpush1.bf16.msra.mxu0 %v1736
      %1757 = vmatprep.subr.bf16.mxu0 0
      %1758 = vmatpush1.bf16.msra.mxu0 %v1737
      %1759 = vmatprep.subr.bf16.mxu0 0
      %1760 = vmatpush1.bf16.msra.mxu0 %v1738
      %1761 = vmatprep.subr.bf16.mxu0 0
      %1762 = vmatpush1.bf16.msra.mxu0 %v1739
      %1763 = vmatprep.subr.bf16.mxu0 0
      %1764 = vmatpush1.bf16.msra.mxu0 %v1740
      %1765 = vmatprep.subr.bf16.mxu0 0
      %1766 = vmatpush1.bf16.msra.mxu0 0
      %1767 = vmatprep.subr.bf16.mxu0 0
      %1768 = vmatpush1.bf16.msra.mxu0 0
      %1769 = vmatprep.subr.bf16.mxu0 0
      %1770 = vmatpush1.bf16.msra.mxu0 0
      %1771 = vmatprep.subr.bf16.mxu0 0
      %1772 = vmatpush1.bf16.msra.mxu0 0
      %1773 = vmatprep.subr.bf16.mxu0 0
      %1774 = vmatpush1.bf16.msra.mxu0 0
      %1775 = vmatprep.subr.bf16.mxu0 0
      %1776 = vmatpush1.bf16.msra.mxu0 0
      %1777 = vmatprep.subr.bf16.mxu0 0
      %1778 = vmatpush1.bf16.msra.mxu0 0
      %1779 = vmatprep.subr.bf16.mxu0 0
      %1780 = vmatpush1.bf16.msra.mxu0 0
      %1781 = vmatprep.mubr.bf16.mxu0 0
      %1782 = vmatmul.mubr.bf16.gmra.mrb[0].mxu0 %v1699
      %v1783 = vpop.f32.mrb[0].mxu0
      %v1784 = vadd.f32 0.0, %v1783
      %v1785 = vpop.f32.mrb[0].mxu0
      %v1786 = vpop.f32.mrb[0].mxu0
      %v1787 = vadd.f32 0.0, %v1786
      %v1788 = vpop.f32.mrb[0].mxu0
      %1789 = vdwg.mxu0
      %v1790 = vadd.f32 %v1568, %v1784
      %v1791 = vadd.f32 %v1569, %v1787
      %v1792 = vld [vmem:[%s3] sm:$0x1]
      %v1794 = vlaneseq
      %v1795 = vshrl.u32 %v1794, 7
      %v1796 = vsub.s32 0, %v1795
      %v1797 = vrot.slane %v1792, %v1796
      %v1799 = vadd.f32 %v1790, %v1797
      %v1800 = vadd.f32 %v1791, %v1797
      %v1801 = vmax.f32 %v1799, 0.0
      %v1802 = vmax.f32 %v1800, 0.0
      %v1805 = vcombine.high %v1801, %v1801
      %v1806 = vcombine.high %v1802, %v1802
      %1809 = vst [vmem:[%s311] sm:$0xf] %v1801
      %1810 = vst [vmem:[%s311 + $0x4] sm:$0xf] %v1805
      %1811 = vst [vmem:[%s311 + $0x8] sm:$0xf] %v1802
      %1812 = vst [vmem:[%s311 + $0xc] sm:$0xf] %v1806
      %s1813 = smul.u32 4, %s20
      %p1814 = scmp.lt.s32.totalorder %s19, 1
      %s1815 = scalar_select %p1814, %s19, 1
      %p1816 = scmp.lt.s32.totalorder %s1813, 3
      %s1817 = scalar_select %p1816, %s1813, 3
      %s1818 = smul.addr %s1815, 4
      %s1819 = sadd.s32 %s1817, %s1818
      %s1820 = smul.addr %s1819, 4
      %s1821 = scalar_lea.vmem %s4, %s1820
      // Predicated region
      $region37: #{patch_embed_forward.3} parent=35 // pred_check
        %p1822 = pneg %p149
      $region38: #{patch_embed_forward.3} parent=35 // pred_check_branch
        %1824 = sbr.rel (%p1822) target = $region40
      $region39: #{patch_embed_forward.3} parent=35 // pred_region
        %s1825 = smul.u32 4, %s20
      $region40: #{patch_embed_forward.3} parent=35 // pred_fallthru
        _
    $region36: #{patch_embed_forward.3} parent=5 // pred_fallthru
      _
    %p1826 = scmp.le.s32.totalorder 2, %s10
    // Predicated region
    $region41: #{patch_embed_forward.3} parent=5 // pred_check
      %p1827 = pneg %p1826
    $region42: #{patch_embed_forward.3} parent=5 // pred_check_branch
      %1829 = sbr.rel (%p1827) target = $region44
    $region43: #{patch_embed_forward.3} parent=5 // pred_region
      %s1830 = ssub.s32 %s10, 2
      // Predicated region
      $region45: #{patch_embed_forward.3} parent=43 // pred_check
        %p1831 = pneg %p155
      $region46: #{patch_embed_forward.3} parent=43 // pred_check_branch
        %1833 = sbr.rel (%p1831) target = $region48
      $region47: #{patch_embed_forward.3} parent=43 // pred_region
        %s1834 = smul.u32 4, %s22
        %p1835 = scmp.lt.s32.totalorder %s21, 1
        %s1836 = scalar_select %p1835, %s21, 1
        %p1837 = scmp.lt.s32.totalorder %s1834, 3
        %s1838 = scalar_select %p1837, %s1834, 3
        %s1839 = smul.addr %s1836, 4
        %s1840 = sadd.s32 %s1838, %s1839
        %s1841 = smul.addr %s1840, 4
        %s1842 = scalar_lea.vmem %s4, %s1841
      $region48: #{patch_embed_forward.3} parent=43 // pred_fallthru
        _
    $region44: #{patch_embed_forward.3} parent=5 // pred_fallthru
      _
  $region6: #{patch_embed_forward.3} parent=0 // loop_footer
    %s14 = sadd.s32 1, %s10
  $region7: #{patch_embed_forward.3} parent=0 // loop_footer_branch
    %9 = sbr.rel target = $region3
  $region8: #{patch_embed_forward.3} parent=0 // loop_exit
    _

</llo_original>
